<compile_context>
chip_gen: v7x
topology: tpu7x:2x2x1
jax: 0.10.0
libtpu: 0.0.40
codegen_flags: <defaults>
</compile_context>

<pallas_src>
import numpy as np
import jax
import jax.numpy as jnp
from jax.experimental import pallas as pl
from jax.experimental.pallas import tpu as pltpu

HIDDEN = (400, 300, 200)


def _round_up(n, m):
    return ((n + m - 1) // m) * m


def make_actor_kernel(action_scale, action_shift, ones_cols):
    """Kernel closure; ones_cols are the activation columns that must be set
    to 1.0 so the bias row folded into the next weight matrix is applied."""
    c1, c2, c3 = ones_cols

    def actor_kernel(x_ref, w1_ref, w2_ref, w3_ref, w4_ref, o_ref):
        # layer 1: Linear(state_dim -> 400) + ReLU   (bias is row `state_dim` of w1)
        h = jnp.dot(x_ref[...].astype(jnp.bfloat16), w1_ref[...],
                    preferred_element_type=jnp.float32)
        h = jnp.maximum(h, 0.0)
        ids = jax.lax.broadcasted_iota(jnp.int32, h.shape, 1)
        h = jnp.where(ids == c1, 1.0, h)          # insert 1.0 for the next bias row

        # layer 2: Linear(400 -> 300) + ReLU
        h = jnp.dot(h.astype(jnp.bfloat16), w2_ref[...],
                    preferred_element_type=jnp.float32)
        h = jnp.maximum(h, 0.0)
        ids = jax.lax.broadcasted_iota(jnp.int32, h.shape, 1)
        h = jnp.where(ids == c2, 1.0, h)

        # layer 3: Linear(300 -> 200) + ReLU
        h = jnp.dot(h.astype(jnp.bfloat16), w3_ref[...],
                    preferred_element_type=jnp.float32)
        h = jnp.maximum(h, 0.0)
        ids = jax.lax.broadcasted_iota(jnp.int32, h.shape, 1)
        h = jnp.where(ids == c3, 1.0, h)

        # layer 4: Linear(200 -> action_dim), then
        #   out = diff(action_bounds) * tanh(.) + mean(action_bounds)
        h = jnp.dot(h.astype(jnp.bfloat16), w4_ref[...],
                    preferred_element_type=jnp.float32)
        o_ref[...] = (action_scale * jnp.tanh(h) + action_shift).astype(o_ref.dtype)

    return actor_kernel


def init_actor_params(key, state_dim, action_dim):
    """nn.Linear-style init (U(-1/sqrt(fan_in))) packed into lane-padded,
    bias-augmented bf16 matrices.  Matrix i has shape
    [round_up(fan_in+1,128), round_up(fan_out(+1),128)]; the bias sits in row
    `fan_in` (the position the kernel's "ones column" multiplies)."""
    dims = (state_dim,) + HIDDEN + (action_dim,)
    # padded widths of each activation: input, h1, h2, h3 need +1 for the ones col
    pads = [_round_up(dims[i] + (1 if i < 4 else 0), 128) for i in range(5)]
    packed = []
    for i in range(4):
        fan_in, fan_out = dims[i], dims[i + 1]
        key, kw, kb = jax.random.split(key, 3)
        bound = 1.0 / np.sqrt(fan_in)
        w = jax.random.uniform(kw, (fan_in, fan_out), jnp.float32,
                               minval=-bound, maxval=bound)
        b = jax.random.uniform(kb, (fan_out,), jnp.float32,
                               minval=-bound, maxval=bound)
        wa = jnp.zeros((pads[i], pads[i + 1]), jnp.float32)
        wa = wa.at[:fan_in, :fan_out].set(w)
        wa = wa.at[fan_in, :fan_out].set(b)      # folded bias row
        packed.append(wa.astype(jnp.bfloat16))
    return packed, dims


def actor_forward(x, packed_ws, dims, action_bounds):
    """x: [B, state_dim] f32.  packed_ws: 4 padded bf16 bias-augmented matrices."""
    state_dim, action_dim = dims[0], dims[-1]
    # Matches the PyTorch forward exactly (scale = high - low, shift = mean).
    action_scale = float(np.diff(np.asarray(action_bounds))[0])
    action_shift = float(np.mean(np.asarray(action_bounds)))

    B = x.shape[0]
    in_pad = packed_ws[0].shape[0]
    out_pad = packed_ws[-1].shape[1]

    # batch tile: sublane-aligned, up to 128 rows per grid step
    tb = 128 if B >= 128 else _round_up(max(B, 1), 8)
    b_pad = _round_up(B, tb)
    grid = (b_pad // tb,)

    # lane-padded input with the "ones" column at index state_dim
    x_aug = jnp.zeros((b_pad, in_pad), jnp.float32)
    x_aug = x_aug.at[:B, :state_dim].set(x.astype(jnp.float32))
    x_aug = x_aug.at[:B, state_dim].set(1.0)

    kernel = make_actor_kernel(action_scale, action_shift,
                               ones_cols=(dims[1], dims[2], dims[3]))

    # weights: full-array blocks with constant index_map -> fetched once,
    # resident in VMEM across all batch grid steps.
    w_specs = [pl.BlockSpec(w.shape, lambda i: (0, 0)) for w in packed_ws]

    out = pl.pallas_call(
        kernel,
        out_shape=jax.ShapeDtypeStruct((b_pad, out_pad), jnp.float32),
        grid=grid,
        in_specs=[pl.BlockSpec((tb, in_pad), lambda i: (i, 0))] + w_specs,
        out_specs=pl.BlockSpec((tb, out_pad), lambda i: (i, 0)),
        compiler_params=pltpu.CompilerParams(
            dimension_semantics=("parallel",)),
    )(x_aug, *packed_ws)

    return out[:B, :action_dim]


def actor_reference(x, packed_ws, dims, action_bounds):
    """Pure-JAX f32 reference using the same (bf16-rounded) parameters."""
    scale = float(np.diff(np.asarray(action_bounds))[0])
    shift = float(np.mean(np.asarray(action_bounds)))
    h = x.astype(jnp.float32)
    for i in range(4):
        fan_in, fan_out = dims[i], dims[i + 1]
        w = packed_ws[i][:fan_in, :fan_out].astype(jnp.float32)
        b = packed_ws[i][fan_in, :fan_out].astype(jnp.float32)
        h = h @ w + b
        if i < 3:
            h = jnp.maximum(h, 0.0)
    return scale * jnp.tanh(h) + shift


if __name__ == "__main__":
    state_dim = 16
    action_dim = 4
    batch = 2
    action_bounds = (-2.0, 2.0)

    key = jax.random.PRNGKey(0)
    key, kx = jax.random.split(key)
    packed_ws, dims = init_actor_params(key, state_dim, action_dim)
    x = jax.random.normal(kx, (batch, state_dim), jnp.float32)

    out = actor_forward(x, packed_ws, dims, action_bounds)
    out = jax.block_until_ready(out)

    ref = actor_reference(x, packed_ws, dims, action_bounds)
    assert out.shape == (batch, action_dim), out.shape
    # bf16 activations inside the kernel vs f32 reference -> looser tolerance
    np.testing.assert_allclose(np.asarray(out), np.asarray(ref),
                               rtol=5e-2, atol=5e-2)
    print("KERNEL_OK")
</pallas_src>

<mosaic_0001>
module attributes {stable_mosaic.version = 11 : i64} {
  func.func @actor_kernel(%arg0: i32, %arg1: memref<8x128xf32, #tpu.memory_space<vmem>>, %arg2: memref<128x512xbf16, #tpu.memory_space<vmem>>, %arg3: memref<512x384xbf16, #tpu.memory_space<vmem>>, %arg4: memref<384x256xbf16, #tpu.memory_space<vmem>>, %arg5: memref<256x128xbf16, #tpu.memory_space<vmem>>, %arg6: memref<8x128xf32, #tpu.memory_space<vmem>>) attributes {dimension_semantics = [#tpu.dimension_semantics<parallel>], iteration_bounds = array<i64: 1>, scalar_prefetch = 0 : i64, scratch_operands = 0 : i64, tpu.core_type = #tpu.core_type<tc>, window_params = [{transform_indices = @transform_0, window_bounds = array<i64: 8, 128>}, {pipeline_mode = #tpu.pipeline_mode<synchronous>, transform_indices = @transform_1, window_bounds = array<i64: 128, 512>}, {pipeline_mode = #tpu.pipeline_mode<synchronous>, transform_indices = @transform_2, window_bounds = array<i64: 512, 384>}, {pipeline_mode = #tpu.pipeline_mode<synchronous>, transform_indices = @transform_3, window_bounds = array<i64: 384, 256>}, {pipeline_mode = #tpu.pipeline_mode<synchronous>, transform_indices = @transform_4, window_bounds = array<i64: 256, 128>}, {transform_indices = @transform_5, window_bounds = array<i64: 8, 128>}]} {
    %c0 = arith.constant 0 : index
    %c0_0 = arith.constant 0 : index
    %0 = vector.load %arg1[%c0, %c0_0] : memref<8x128xf32, #tpu.memory_space<vmem>>, vector<8x128xf32>
    %1 = arith.truncf %0 : vector<8x128xf32> to vector<8x128xbf16>
    %c0_1 = arith.constant 0 : index
    %c0_2 = arith.constant 0 : index
    %2 = vector.load %arg2[%c0_1, %c0_2] : memref<128x512xbf16, #tpu.memory_space<vmem>>, vector<128x512xbf16>
    %cst = arith.constant dense<0.000000e+00> : vector<8x512xf32>
    %3 = tpu.matmul %1, %2, %cst {dimension_numbers = #tpu.dot_dimension_numbers<[1], [0], [0], [1], [0, 0, 1, 1], [], []>} : vector<8x128xbf16>, vector<128x512xbf16>, vector<8x512xf32> -> vector<8x512xf32>
    %cst_3 = arith.constant 0.000000e+00 : f32
    %4 = vector.broadcast %cst_3 : f32 to vector<8x512xf32>
    %5 = arith.maximumf %3, %4 : vector<8x512xf32>
    %6 = tpu.iota {dimensions = array<i32: 1>} : vector<8x512xi32>
    %c400_i32 = arith.constant 400 : i32
    %7 = vector.broadcast %c400_i32 : i32 to vector<8x512xi32>
    %8 = arith.cmpi eq, %6, %7 : vector<8x512xi32>
    %cst_4 = arith.constant 1.000000e+00 : f32
    %9 = vector.broadcast %cst_4 : f32 to vector<8x512xf32>
    %10 = arith.select %8, %9, %5 : vector<8x512xi1>, vector<8x512xf32>
    %11 = arith.truncf %10 : vector<8x512xf32> to vector<8x512xbf16>
    %c0_5 = arith.constant 0 : index
    %c0_6 = arith.constant 0 : index
    %12 = vector.load %arg3[%c0_5, %c0_6] : memref<512x384xbf16, #tpu.memory_space<vmem>>, vector<512x384xbf16>
    %cst_7 = arith.constant dense<0.000000e+00> : vector<8x384xf32>
    %13 = tpu.matmul %11, %12, %cst_7 {dimension_numbers = #tpu.dot_dimension_numbers<[1], [0], [0], [1], [0, 0, 1, 1], [], []>} : vector<8x512xbf16>, vector<512x384xbf16>, vector<8x384xf32> -> vector<8x384xf32>
    %cst_8 = arith.constant 0.000000e+00 : f32
    %14 = vector.broadcast %cst_8 : f32 to vector<8x384xf32>
    %15 = arith.maximumf %13, %14 : vector<8x384xf32>
    %16 = tpu.iota {dimensions = array<i32: 1>} : vector<8x384xi32>
    %c300_i32 = arith.constant 300 : i32
    %17 = vector.broadcast %c300_i32 : i32 to vector<8x384xi32>
    %18 = arith.cmpi eq, %16, %17 : vector<8x384xi32>
    %cst_9 = arith.constant 1.000000e+00 : f32
    %19 = vector.broadcast %cst_9 : f32 to vector<8x384xf32>
    %20 = arith.select %18, %19, %15 : vector<8x384xi1>, vector<8x384xf32>
    %21 = arith.truncf %20 : vector<8x384xf32> to vector<8x384xbf16>
    %c0_10 = arith.constant 0 : index
    %c0_11 = arith.constant 0 : index
    %22 = vector.load %arg4[%c0_10, %c0_11] : memref<384x256xbf16, #tpu.memory_space<vmem>>, vector<384x256xbf16>
    %cst_12 = arith.constant dense<0.000000e+00> : vector<8x256xf32>
    %23 = tpu.matmul %21, %22, %cst_12 {dimension_numbers = #tpu.dot_dimension_numbers<[1], [0], [0], [1], [0, 0, 1, 1], [], []>} : vector<8x384xbf16>, vector<384x256xbf16>, vector<8x256xf32> -> vector<8x256xf32>
    %cst_13 = arith.constant 0.000000e+00 : f32
    %24 = vector.broadcast %cst_13 : f32 to vector<8x256xf32>
    %25 = arith.maximumf %23, %24 : vector<8x256xf32>
    %26 = tpu.iota {dimensions = array<i32: 1>} : vector<8x256xi32>
    %c200_i32 = arith.constant 200 : i32
    %27 = vector.broadcast %c200_i32 : i32 to vector<8x256xi32>
    %28 = arith.cmpi eq, %26, %27 : vector<8x256xi32>
    %cst_14 = arith.constant 1.000000e+00 : f32
    %29 = vector.broadcast %cst_14 : f32 to vector<8x256xf32>
    %30 = arith.select %28, %29, %25 : vector<8x256xi1>, vector<8x256xf32>
    %31 = arith.truncf %30 : vector<8x256xf32> to vector<8x256xbf16>
    %c0_15 = arith.constant 0 : index
    %c0_16 = arith.constant 0 : index
    %32 = vector.load %arg5[%c0_15, %c0_16] : memref<256x128xbf16, #tpu.memory_space<vmem>>, vector<256x128xbf16>
    %cst_17 = arith.constant dense<0.000000e+00> : vector<8x128xf32>
    %33 = tpu.matmul %31, %32, %cst_17 {dimension_numbers = #tpu.dot_dimension_numbers<[1], [0], [0], [1], [0, 0, 1, 1], [], []>} : vector<8x256xbf16>, vector<256x128xbf16>, vector<8x128xf32> -> vector<8x128xf32>
    %34 = math.tanh %33 : vector<8x128xf32>
    %cst_18 = arith.constant 4.000000e+00 : f32
    %35 = vector.broadcast %cst_18 : f32 to vector<8x128xf32>
    %36 = arith.mulf %35, %34 : vector<8x128xf32>
    %cst_19 = arith.constant 0.000000e+00 : f32
    %37 = vector.broadcast %cst_19 : f32 to vector<8x128xf32>
    %38 = arith.addf %36, %37 : vector<8x128xf32>
    %c0_20 = arith.constant 0 : index
    %c0_21 = arith.constant 0 : index
    %39 = vector.load %arg6[%c0_20, %c0_21] : memref<8x128xf32, #tpu.memory_space<vmem>>, vector<8x128xf32>
    tpu.vector_store %arg6[%c0_20, %c0_21], %38 {strides = array<i32>} : memref<8x128xf32, #tpu.memory_space<vmem>>, vector<8x128xf32>,
    return
  }
  func.func @transform_0(%arg0: i32) -> (i32, i32) {
    %c0_i32 = arith.constant 0 : i32
    %c0_i32_0 = arith.constant 0 : i32
    return %arg0, %c0_i32 : i32, i32
  }
  func.func @transform_1(%arg0: i32) -> (i32, i32) {
    %c0_i32 = arith.constant 0 : i32
    %c0_i32_0 = arith.constant 0 : i32
    %c0_i32_1 = arith.constant 0 : i32
    return %c0_i32, %c0_i32_0 : i32, i32
  }
  func.func @transform_2(%arg0: i32) -> (i32, i32) {
    %c0_i32 = arith.constant 0 : i32
    %c0_i32_0 = arith.constant 0 : i32
    %c0_i32_1 = arith.constant 0 : i32
    return %c0_i32, %c0_i32_0 : i32, i32
  }
  func.func @transform_3(%arg0: i32) -> (i32, i32) {
    %c0_i32 = arith.constant 0 : i32
    %c0_i32_0 = arith.constant 0 : i32
    %c0_i32_1 = arith.constant 0 : i32
    return %c0_i32, %c0_i32_0 : i32, i32
  }
  func.func @transform_4(%arg0: i32) -> (i32, i32) {
    %c0_i32 = arith.constant 0 : i32
    %c0_i32_0 = arith.constant 0 : i32
    %c0_i32_1 = arith.constant 0 : i32
    return %c0_i32, %c0_i32_0 : i32, i32
  }
  func.func @transform_5(%arg0: i32) -> (i32, i32) {
    %c0_i32 = arith.constant 0 : i32
    %c0_i32_0 = arith.constant 0 : i32
    return %arg0, %c0_i32 : i32, i32
  }
}

</mosaic_0001>

<llo_original>
// kernel: tpu_custom_call.1
$region0: #{tpu_custom_call.1}
  #allocation0 [shape = 'u32[]', space=smem, size = 0x4, offset = 0x4, fixed_abs, tag = 'smem constant byte address 0x4 - core index']
  #allocation1 [shape = 'u32[144,128]{1,0:T(1,128)}', space=vmem, size = 0x12000, scoped, tag = 'internal scratch']
  %s0 = inlined_call_operand.hbm [shape: f32[8,128], index: 0, kind: input, shape index: {}]
  %s1 = inlined_call_operand.hbm [shape: bf16[128,512], index: 1, kind: input, shape index: {}]
  %s2 = inlined_call_operand.hbm [shape: bf16[512,384], index: 2, kind: input, shape index: {}]
  %s3 = inlined_call_operand.hbm [shape: bf16[384,256], index: 3, kind: input, shape index: {}]
  %s4 = inlined_call_operand.hbm [shape: bf16[256,128], index: 4, kind: input, shape index: {}]
  %s5 = inlined_call_operand.hbm [shape: f32[8,128], index: 5, kind: output, shape index: {}]
  %s6 = sld [smem:[#allocation0]]
  $region50: #{tpu_custom_call.1} parent=0
    _
  %s8 = ssub.s32 1, %s6
  %s9 = scalar_select 0, %s8, %s6
  $region1: #{tpu_custom_call.1} parent=0
    #allocation2 [shape = 'u8[4096]{0}', space=vmem, size = 0x1000, scoped, tag = 'input window, operand 0, single buffered']
    #allocation3 [shape = 's32[1]{0}', space=sflag, size = 0x4, scoped, tag = 'scoped memory for tpu_custom_call.1']
    #allocation4 [shape = 's32[1]{0}', space=sflag, size = 0x4, scoped, tag = 'scoped memory for tpu_custom_call.1']
    #allocation5 [shape = 'u8[131072]{0}', space=vmem, size = 0x20000, scoped, tag = 'input window, operand 1, single buffered']
    #allocation6 [shape = 's32[1]{0}', space=sflag, size = 0x4, scoped, tag = 'scoped memory for tpu_custom_call.1']
    #allocation7 [shape = 'u8[393216]{0}', space=vmem, size = 0x60000, scoped, tag = 'input window, operand 2, single buffered']
    #allocation8 [shape = 'u8[196608]{0}', space=vmem, size = 0x30000, scoped, tag = 'input window, operand 3, single buffered']
    #allocation9 [shape = 's32[1]{0}', space=sflag, size = 0x4, scoped, tag = 'scoped memory for tpu_custom_call.1']
    #allocation10 [shape = 'u8[65536]{0}', space=vmem, size = 0x10000, scoped, tag = 'input window, operand 4, single buffered']
    #allocation11 [shape = 'u8[4096]{0}', space=vmem, size = 0x1000, scoped, tag = 'output window, operand 0, single buffered']
    %10 = vsyncpa [#allocation3], 0
    %11 = vsyncpa [#allocation6], 0
    %12 = vsyncpa [#allocation9], 0
    %13 = vsyncpa [#allocation4], 0
    // Predicated region
    $region2: #{tpu_custom_call.1} parent=1 // pred_check
      _
    $region3: #{tpu_custom_call.1} parent=1 // pred_check_branch
      %15 = sbr.rel (0) target = $region5
    $region4: #{tpu_custom_call.1} parent=1 // pred_region
      %s17 = ssub.s32 128, 128
      %18 = vsyncadd [#allocation3], %s17
      %s20 = sshll.u32 [#allocation2], 4
      %s21 = int_to_ptr.vmem [resolvable:$true] %s20
      %23 = dma.hbm_to_vmem [thread:$0]  %s0, 128, %s21, [#allocation3]
    $region5: #{tpu_custom_call.1} parent=1 // pred_fallthru
      _
    // Predicated region
    $region6: #{tpu_custom_call.1} parent=1 // pred_check
      _
    $region7: #{tpu_custom_call.1} parent=1 // pred_check_branch
      %25 = sbr.rel (0) target = $region9
    $region8: #{tpu_custom_call.1} parent=1 // pred_region
      %s27 = ssub.s32 4096, 4096
      %28 = vsyncadd [#allocation6], %s27
      %s29 = sshll.u32 [#allocation5], 4
      %s30 = int_to_ptr.vmem [resolvable:$true] %s29
      %35 = dma.hbm_to_vmem [thread:$0]  %s1, 4096, %s30, [#allocation6], 256, 256, 16
    $region9: #{tpu_custom_call.1} parent=1 // pred_fallthru
      _
    // Predicated region
    $region10: #{tpu_custom_call.1} parent=1 // pred_check
      _
    $region11: #{tpu_custom_call.1} parent=1 // pred_check_branch
      %37 = sbr.rel (0) target = $region13
    $region12: #{tpu_custom_call.1} parent=1 // pred_region
      %s39 = ssub.s32 12288, 12288
      %40 = vsyncadd [#allocation6], %s39
      %s41 = sshll.u32 [#allocation7], 4
      %s42 = int_to_ptr.vmem [resolvable:$true] %s41
      %47 = dma.hbm_to_vmem [thread:$0]  %s2, 12288, %s42, [#allocation6], 192, 192, 12
    $region13: #{tpu_custom_call.1} parent=1 // pred_fallthru
      _
    // Predicated region
    $region14: #{tpu_custom_call.1} parent=1 // pred_check
      _
    $region15: #{tpu_custom_call.1} parent=1 // pred_check_branch
      %49 = sbr.rel (0) target = $region17
    $region16: #{tpu_custom_call.1} parent=1 // pred_region
      %s51 = ssub.s32 6144, 6144
      %52 = vsyncadd [#allocation9], %s51
      %s53 = sshll.u32 [#allocation8], 4
      %s54 = int_to_ptr.vmem [resolvable:$true] %s53
      %59 = dma.hbm_to_vmem [thread:$0]  %s3, 6144, %s54, [#allocation9], 128, 128, 8
    $region17: #{tpu_custom_call.1} parent=1 // pred_fallthru
      _
    // Predicated region
    $region18: #{tpu_custom_call.1} parent=1 // pred_check
      _
    $region19: #{tpu_custom_call.1} parent=1 // pred_check_branch
      %61 = sbr.rel (0) target = $region21
    $region20: #{tpu_custom_call.1} parent=1 // pred_region
      %s63 = ssub.s32 2048, 2048
      %64 = vsyncadd [#allocation9], %s63
      %s65 = sshll.u32 [#allocation10], 4
      %s66 = int_to_ptr.vmem [resolvable:$true] %s65
      %71 = dma.hbm_to_vmem [thread:$0]  %s4, 2048, %s66, [#allocation9], 64, 64, 4
    $region21: #{tpu_custom_call.1} parent=1 // pred_fallthru
      _
    // Predicated region
    $region22: #{tpu_custom_call.1} parent=1 // pred_check
      _
    $region23: #{tpu_custom_call.1} parent=1 // pred_check_branch
      %73 = sbr.rel (0) target = $region25
    $region24: #{tpu_custom_call.1} parent=1 // pred_region
      %74 = dma.done [#allocation3], 128
    $region25: #{tpu_custom_call.1} parent=1 // pred_fallthru
      _
    // Predicated region
    $region26: #{tpu_custom_call.1} parent=1 // pred_check
      _
    $region27: #{tpu_custom_call.1} parent=1 // pred_check_branch
      %76 = sbr.rel (0) target = $region29
    $region28: #{tpu_custom_call.1} parent=1 // pred_region
      %77 = dma.done [#allocation6], 4096
    $region29: #{tpu_custom_call.1} parent=1 // pred_fallthru
      _
    // Predicated region
    $region30: #{tpu_custom_call.1} parent=1 // pred_check
      _
    $region31: #{tpu_custom_call.1} parent=1 // pred_check_branch
      %79 = sbr.rel (0) target = $region33
    $region32: #{tpu_custom_call.1} parent=1 // pred_region
      %80 = dma.done [#allocation6], 12288
    $region33: #{tpu_custom_call.1} parent=1 // pred_fallthru
      _
    // Predicated region
    $region34: #{tpu_custom_call.1} parent=1 // pred_check
      _
    $region35: #{tpu_custom_call.1} parent=1 // pred_check_branch
      %82 = sbr.rel (0) target = $region37
    $region36: #{tpu_custom_call.1} parent=1 // pred_region
      %83 = dma.done [#allocation9], 6144
    $region37: #{tpu_custom_call.1} parent=1 // pred_fallthru
      _
    // Predicated region
    $region38: #{tpu_custom_call.1} parent=1 // pred_check
      _
    $region39: #{tpu_custom_call.1} parent=1 // pred_check_branch
      %85 = sbr.rel (0) target = $region41
    $region40: #{tpu_custom_call.1} parent=1 // pred_region
      %86 = dma.done [#allocation9], 2048
    $region41: #{tpu_custom_call.1} parent=1 // pred_fallthru
      _
    %v88 = vld [vmem:[#allocation2] sm:$0xff]
    %v89 = vpack.c.bf16 %v88, %v88
    %v90 = vld [vmem:[#allocation5] sm:$0xff]
    %v91 = vld [vmem:[#allocation5 + $0x8] sm:$0xff]
    %v92 = vld [vmem:[#allocation5 + $0x10] sm:$0xff]
    %v93 = vld [vmem:[#allocation5 + $0x18] sm:$0xff]
    %v94 = vld [vmem:[#allocation5 + $0x20] sm:$0xff]
    %v95 = vld [vmem:[#allocation5 + $0x28] sm:$0xff]
    %v96 = vld [vmem:[#allocation5 + $0x30] sm:$0xff]
    %v97 = vld [vmem:[#allocation5 + $0x38] sm:$0xff]
    %v98 = vld [vmem:[#allocation5 + $0x40] sm:$0xff]
    %v99 = vld [vmem:[#allocation5 + $0x48] sm:$0xff]
    %v100 = vld [vmem:[#allocation5 + $0x50] sm:$0xff]
    %v101 = vld [vmem:[#allocation5 + $0x58] sm:$0xff]
    %v102 = vld [vmem:[#allocation5 + $0x60] sm:$0xff]
    %v103 = vld [vmem:[#allocation5 + $0x68] sm:$0xff]
    %v104 = vld [vmem:[#allocation5 + $0x70] sm:$0xff]
    %v105 = vld [vmem:[#allocation5 + $0x78] sm:$0xff]
    %v106 = vld [vmem:[#allocation5 + $0x80] sm:$0xff]
    %v107 = vld [vmem:[#allocation5 + $0x88] sm:$0xff]
    %v108 = vld [vmem:[#allocation5 + $0x90] sm:$0xff]
    %v109 = vld [vmem:[#allocation5 + $0x98] sm:$0xff]
    %v110 = vld [vmem:[#allocation5 + $0xa0] sm:$0xff]
    %v111 = vld [vmem:[#allocation5 + $0xa8] sm:$0xff]
    %v112 = vld [vmem:[#allocation5 + $0xb0] sm:$0xff]
    %v113 = vld [vmem:[#allocation5 + $0xb8] sm:$0xff]
    %v114 = vld [vmem:[#allocation5 + $0xc0] sm:$0xff]
    %v115 = vld [vmem:[#allocation5 + $0xc8] sm:$0xff]
    %v116 = vld [vmem:[#allocation5 + $0xd0] sm:$0xff]
    %v117 = vld [vmem:[#allocation5 + $0xd8] sm:$0xff]
    %v118 = vld [vmem:[#allocation5 + $0xe0] sm:$0xff]
    %v119 = vld [vmem:[#allocation5 + $0xe8] sm:$0xff]
    %v120 = vld [vmem:[#allocation5 + $0xf0] sm:$0xff]
    %v121 = vld [vmem:[#allocation5 + $0xf8] sm:$0xff]
    %v154 = vunpack.c.l.b16 %v90
    %v155 = vunpack.c.h.b16 %v90
    %v156 = vunpack.c.l.b16 %v91
    %v157 = vunpack.c.h.b16 %v91
    %v158 = vunpack.c.l.b16 %v92
    %v159 = vunpack.c.h.b16 %v92
    %v160 = vunpack.c.l.b16 %v93
    %v161 = vunpack.c.h.b16 %v93
    %v162 = vunpack.c.l.b16 %v94
    %v163 = vunpack.c.h.b16 %v94
    %v164 = vunpack.c.l.b16 %v95
    %v165 = vunpack.c.h.b16 %v95
    %v166 = vunpack.c.l.b16 %v96
    %v167 = vunpack.c.h.b16 %v96
    %v168 = vunpack.c.l.b16 %v97
    %v169 = vunpack.c.h.b16 %v97
    %v170 = vunpack.c.l.b16 %v98
    %v171 = vunpack.c.h.b16 %v98
    %v172 = vunpack.c.l.b16 %v99
    %v173 = vunpack.c.h.b16 %v99
    %v174 = vunpack.c.l.b16 %v100
    %v175 = vunpack.c.h.b16 %v100
    %v176 = vunpack.c.l.b16 %v101
    %v177 = vunpack.c.h.b16 %v101
    %v178 = vunpack.c.l.b16 %v102
    %v179 = vunpack.c.h.b16 %v102
    %v180 = vunpack.c.l.b16 %v103
    %v181 = vunpack.c.h.b16 %v103
    %v182 = vunpack.c.l.b16 %v104
    %v183 = vunpack.c.h.b16 %v104
    %v184 = vunpack.c.l.b16 %v105
    %v185 = vunpack.c.h.b16 %v105
    %v186 = vunpack.c.l.b16 %v106
    %v187 = vunpack.c.h.b16 %v106
    %v188 = vunpack.c.l.b16 %v107
    %v189 = vunpack.c.h.b16 %v107
    %v190 = vunpack.c.l.b16 %v108
    %v191 = vunpack.c.h.b16 %v108
    %v192 = vunpack.c.l.b16 %v109
    %v193 = vunpack.c.h.b16 %v109
    %v194 = vunpack.c.l.b16 %v110
    %v195 = vunpack.c.h.b16 %v110
    %v196 = vunpack.c.l.b16 %v111
    %v197 = vunpack.c.h.b16 %v111
    %v198 = vunpack.c.l.b16 %v112
    %v199 = vunpack.c.h.b16 %v112
    %v200 = vunpack.c.l.b16 %v113
    %v201 = vunpack.c.h.b16 %v113
    %v202 = vunpack.c.l.b16 %v114
    %v203 = vunpack.c.h.b16 %v114
    %v204 = vunpack.c.l.b16 %v115
    %v205 = vunpack.c.h.b16 %v115
    %v206 = vunpack.c.l.b16 %v116
    %v207 = vunpack.c.h.b16 %v116
    %v208 = vunpack.c.l.b16 %v117
    %v209 = vunpack.c.h.b16 %v117
    %v210 = vunpack.c.l.b16 %v118
    %v211 = vunpack.c.h.b16 %v118
    %v212 = vunpack.c.l.b16 %v119
    %v213 = vunpack.c.h.b16 %v119
    %v214 = vunpack.c.l.b16 %v120
    %v215 = vunpack.c.h.b16 %v120
    %v216 = vunpack.c.l.b16 %v121
    %v217 = vunpack.c.h.b16 %v121
    %v218 = vpack.c.b16 %v158, %v154
    %v219 = vpack.c.b16 %v159, %v155
    %v220 = vpack.c.b16 %v160, %v156
    %v221 = vpack.c.b16 %v161, %v157
    %v222 = vpack.c.b16 %v166, %v162
    %v223 = vpack.c.b16 %v167, %v163
    %v224 = vpack.c.b16 %v168, %v164
    %v225 = vpack.c.b16 %v169, %v165
    %v226 = vpack.c.b16 %v174, %v170
    %v227 = vpack.c.b16 %v175, %v171
    %v228 = vpack.c.b16 %v176, %v172
    %v229 = vpack.c.b16 %v177, %v173
    %v230 = vpack.c.b16 %v182, %v178
    %v231 = vpack.c.b16 %v183, %v179
    %v232 = vpack.c.b16 %v184, %v180
    %v233 = vpack.c.b16 %v185, %v181
    %v234 = vpack.c.b16 %v190, %v186
    %v235 = vpack.c.b16 %v191, %v187
    %v236 = vpack.c.b16 %v192, %v188
    %v237 = vpack.c.b16 %v193, %v189
    %v238 = vpack.c.b16 %v198, %v194
    %v239 = vpack.c.b16 %v199, %v195
    %v240 = vpack.c.b16 %v200, %v196
    %v241 = vpack.c.b16 %v201, %v197
    %v242 = vpack.c.b16 %v206, %v202
    %v243 = vpack.c.b16 %v207, %v203
    %v244 = vpack.c.b16 %v208, %v204
    %v245 = vpack.c.b16 %v209, %v205
    %v246 = vpack.c.b16 %v214, %v210
    %v247 = vpack.c.b16 %v215, %v211
    %v248 = vpack.c.b16 %v216, %v212
    %v249 = vpack.c.b16 %v217, %v213
    %282 = vmatprep.subr.bf16.mxu0 %v219
    %283 = vmatpush1.bf16.msra.mxu0 %v218
    %284 = vmatprep.subr.bf16.mxu0 %v223
    %285 = vmatpush1.bf16.msra.mxu0 %v222
    %286 = vmatprep.subr.bf16.mxu0 %v227
    %287 = vmatpush1.bf16.msra.mxu0 %v226
    %288 = vmatprep.subr.bf16.mxu0 %v231
    %289 = vmatpush1.bf16.msra.mxu0 %v230
    %290 = vmatprep.subr.bf16.mxu0 %v235
    %291 = vmatpush1.bf16.msra.mxu0 %v234
    %292 = vmatprep.subr.bf16.mxu0 %v239
    %293 = vmatpush1.bf16.msra.mxu0 %v238
    %294 = vmatprep.subr.bf16.mxu0 %v243
    %295 = vmatpush1.bf16.msra.mxu0 %v242
    %296 = vmatprep.subr.bf16.mxu0 %v247
    %297 = vmatpush1.bf16.msra.mxu0 %v246
    %298 = vmatprep.subr.bf16.mxu0 0
    %299 = vmatpush1.bf16.msra.mxu0 0
    %300 = vmatprep.subr.bf16.mxu0 0
    %301 = vmatpush1.bf16.msra.mxu0 0
    %302 = vmatprep.subr.bf16.mxu0 0
    %303 = vmatpush1.bf16.msra.mxu0 0
    %304 = vmatprep.subr.bf16.mxu0 0
    %305 = vmatpush1.bf16.msra.mxu0 0
    %306 = vmatprep.subr.bf16.mxu0 0
    %307 = vmatpush1.bf16.msra.mxu0 0
    %308 = vmatprep.subr.bf16.mxu0 0
    %309 = vmatpush1.bf16.msra.mxu0 0
    %310 = vmatprep.subr.bf16.mxu0 0
    %311 = vmatpush1.bf16.msra.mxu0 0
    %312 = vmatprep.subr.bf16.mxu0 0
    %313 = vmatpush1.bf16.msra.mxu0 0
    %314 = vmatprep.mubr.bf16.mxu0 0
    %315 = vmatmul.mubr.bf16.gmra.mrb[0].mxu0 %v89
    %v316 = vpop.f32.mrb[0].mxu0
    %v317 = vadd.f32 0.0, %v316
    %v318 = vpop.f32.mrb[0].mxu0
    %v319 = vadd.f32 0.0, %v318
    %v320 = vpop.f32.mrb[0].mxu0
    %v321 = vpop.f32.mrb[0].mxu0
    %322 = vdwg.mxu0
    %323 = vmatprep.subr.bf16.mxu0 %v221
    %324 = vmatpush1.bf16.msra.mxu0 %v220
    %325 = vmatprep.subr.bf16.mxu0 %v225
    %326 = vmatpush1.bf16.msra.mxu0 %v224
    %327 = vmatprep.subr.bf16.mxu0 %v229
    %328 = vmatpush1.bf16.msra.mxu0 %v228
    %329 = vmatprep.subr.bf16.mxu0 %v233
    %330 = vmatpush1.bf16.msra.mxu0 %v232
    %331 = vmatprep.subr.bf16.mxu0 %v237
    %332 = vmatpush1.bf16.msra.mxu0 %v236
    %333 = vmatprep.subr.bf16.mxu0 %v241
    %334 = vmatpush1.bf16.msra.mxu0 %v240
    %335 = vmatprep.subr.bf16.mxu0 %v245
    %336 = vmatpush1.bf16.msra.mxu0 %v244
    %337 = vmatprep.subr.bf16.mxu0 %v249
    %338 = vmatpush1.bf16.msra.mxu0 %v248
    %339 = vmatprep.subr.bf16.mxu0 0
    %340 = vmatpush1.bf16.msra.mxu0 0
    %341 = vmatprep.subr.bf16.mxu0 0
    %342 = vmatpush1.bf16.msra.mxu0 0
    %343 = vmatprep.subr.bf16.mxu0 0
    %344 = vmatpush1.bf16.msra.mxu0 0
    %345 = vmatprep.subr.bf16.mxu0 0
    %346 = vmatpush1.bf16.msra.mxu0 0
    %347 = vmatprep.subr.bf16.mxu0 0
    %348 = vmatpush1.bf16.msra.mxu0 0
    %349 = vmatprep.subr.bf16.mxu0 0
    %350 = vmatpush1.bf16.msra.mxu0 0
    %351 = vmatprep.subr.bf16.mxu0 0
    %352 = vmatpush1.bf16.msra.mxu0 0
    %353 = vmatprep.subr.bf16.mxu0 0
    %354 = vmatpush1.bf16.msra.mxu0 0
    %355 = vmatprep.mubr.bf16.mxu0 0
    %356 = vmatmul.mubr.bf16.gmra.mrb[0].mxu0 %v89
    %v357 = vpop.f32.mrb[0].mxu0
    %v358 = vadd.f32 0.0, %v357
    %v359 = vpop.f32.mrb[0].mxu0
    %v360 = vadd.f32 0.0, %v359
    %v361 = vpop.f32.mrb[0].mxu0
    %v362 = vpop.f32.mrb[0].mxu0
    %363 = vdwg.mxu0
    %v364 = vmax.f32 %v317, 0.0
    %v365 = vmax.f32 %v319, 0.0
    %v366 = vmax.f32 %v358, 0.0
    %v367 = vmax.f32 %v360, 0.0
    %v368 = vlaneseq
    %v369 = vand.u32 %v368, 127
    %v370 = vadd.s32 %v369, 128
    %v371 = vadd.s32 %v369, 256
    %v372 = vadd.s32 %v369, 384
    %vm373 = vcmp.eq.s32.totalorder %v369, 400
    %vm374 = vcmp.eq.s32.totalorder %v370, 400
    %vm375 = vcmp.eq.s32.totalorder %v371, 400
    %vm376 = vcmp.eq.s32.totalorder %v372, 400
    %v377 = vsel %vm373, 1.0, %v364
    %v378 = vsel %vm374, 1.0, %v365
    %v379 = vsel %vm375, 1.0, %v366
    %v380 = vsel %vm376, 1.0, %v367
    %v381 = vpack.c.bf16 %v377, %v377
    %v382 = vpack.c.bf16 %v378, %v378
    %v383 = vpack.c.bf16 %v379, %v379
    %v384 = vpack.c.bf16 %v380, %v380
    %v385 = vld [vmem:[#allocation7] sm:$0xff]
    %v386 = vld [vmem:[#allocation7 + $0x8] sm:$0xf]
    %v387 = vld [vmem:[#allocation7 + $0xc] sm:$0xff]
    %v388 = vld [vmem:[#allocation7 + $0x14] sm:$0xf]
    %v389 = vld [vmem:[#allocation7 + $0x18] sm:$0xff]
    %v390 = vld [vmem:[#allocation7 + $0x20] sm:$0xf]
    %v391 = vld [vmem:[#allocation7 + $0x24] sm:$0xff]
    %v392 = vld [vmem:[#allocation7 + $0x2c] sm:$0xf]
    %v393 = vld [vmem:[#allocation7 + $0x30] sm:$0xff]
    %v394 = vld [vmem:[#allocation7 + $0x38] sm:$0xf]
    %v395 = vld [vmem:[#allocation7 + $0x3c] sm:$0xff]
    %v396 = vld [vmem:[#allocation7 + $0x44] sm:$0xf]
    %v397 = vld [vmem:[#allocation7 + $0x48] sm:$0xff]
    %v398 = vld [vmem:[#allocation7 + $0x50] sm:$0xf]
    %v399 = vld [vmem:[#allocation7 + $0x54] sm:$0xff]
    %v400 = vld [vmem:[#allocation7 + $0x5c] sm:$0xf]
    %v401 = vld [vmem:[#allocation7 + $0x60] sm:$0xff]
    %v402 = vld [vmem:[#allocation7 + $0x68] sm:$0xf]
    %v403 = vld [vmem:[#allocation7 + $0x6c] sm:$0xff]
    %v404 = vld [vmem:[#allocation7 + $0x74] sm:$0xf]
    %v405 = vld [vmem:[#allocation7 + $0x78] sm:$0xff]
    %v406 = vld [vmem:[#allocation7 + $0x80] sm:$0xf]
    %v407 = vld [vmem:[#allocation7 + $0x84] sm:$0xff]
    %v408 = vld [vmem:[#allocation7 + $0x8c] sm:$0xf]
    %v409 = vld [vmem:[#allocation7 + $0x90] sm:$0xff]
    %v410 = vld [vmem:[#allocation7 + $0x98] sm:$0xf]
    %v411 = vld [vmem:[#allocation7 + $0x9c] sm:$0xff]
    %v412 = vld [vmem:[#allocation7 + $0xa4] sm:$0xf]
    %v413 = vld [vmem:[#allocation7 + $0xa8] sm:$0xff]
    %v414 = vld [vmem:[#allocation7 + $0xb0] sm:$0xf]
    %v415 = vld [vmem:[#allocation7 + $0xb4] sm:$0xff]
    %v416 = vld [vmem:[#allocation7 + $0xbc] sm:$0xf]
    %v417 = vld [vmem:[#allocation7 + $0xc0] sm:$0xff]
    %v418 = vld [vmem:[#allocation7 + $0xc8] sm:$0xf]
    %v419 = vld [vmem:[#allocation7 + $0xcc] sm:$0xff]
    %v420 = vld [vmem:[#allocation7 + $0xd4] sm:$0xf]
    %v421 = vld [vmem:[#allocation7 + $0xd8] sm:$0xff]
    %v422 = vld [vmem:[#allocation7 + $0xe0] sm:$0xf]
    %v423 = vld [vmem:[#allocation7 + $0xe4] sm:$0xff]
    %v424 = vld [vmem:[#allocation7 + $0xec] sm:$0xf]
    %v425 = vld [vmem:[#allocation7 + $0xf0] sm:$0xff]
    %v426 = vld [vmem:[#allocation7 + $0xf8] sm:$0xf]
    %v427 = vld [vmem:[#allocation7 + $0xfc] sm:$0xff]
    %v428 = vld [vmem:[#allocation7 + $0x104] sm:$0xf]
    %v429 = vld [vmem:[#allocation7 + $0x108] sm:$0xff]
    %v430 = vld [vmem:[#allocation7 + $0x110] sm:$0xf]
    %v431 = vld [vmem:[#allocation7 + $0x114] sm:$0xff]
    %v432 = vld [vmem:[#allocation7 + $0x11c] sm:$0xf]
    %v433 = vld [vmem:[#allocation7 + $0x120] sm:$0xff]
    %v434 = vld [vmem:[#allocation7 + $0x128] sm:$0xf]
    %v435 = vld [vmem:[#allocation7 + $0x12c] sm:$0xff]
    %v436 = vld [vmem:[#allocation7 + $0x134] sm:$0xf]
    %v437 = vld [vmem:[#allocation7 + $0x138] sm:$0xff]
    %v438 = vld [vmem:[#allocation7 + $0x140] sm:$0xf]
    %v439 = vld [vmem:[#allocation7 + $0x144] sm:$0xff]
    %v440 = vld [vmem:[#allocation7 + $0x14c] sm:$0xf]
    %v441 = vld [vmem:[#allocation7 + $0x150] sm:$0xff]
    %v442 = vld [vmem:[#allocation7 + $0x158] sm:$0xf]
    %v443 = vld [vmem:[#allocation7 + $0x15c] sm:$0xff]
    %v444 = vld [vmem:[#allocation7 + $0x164] sm:$0xf]
    %v445 = vld [vmem:[#allocation7 + $0x168] sm:$0xff]
    %v446 = vld [vmem:[#allocation7 + $0x170] sm:$0xf]
    %v447 = vld [vmem:[#allocation7 + $0x174] sm:$0xff]
    %v448 = vld [vmem:[#allocation7 + $0x17c] sm:$0xf]
    %v449 = vld [vmem:[#allocation7 + $0x180] sm:$0xff]
    %v450 = vld [vmem:[#allocation7 + $0x188] sm:$0xf]
    %v451 = vld [vmem:[#allocation7 + $0x18c] sm:$0xff]
    %v452 = vld [vmem:[#allocation7 + $0x194] sm:$0xf]
    %v453 = vld [vmem:[#allocation7 + $0x198] sm:$0xff]
    %v454 = vld [vmem:[#allocation7 + $0x1a0] sm:$0xf]
    %v455 = vld [vmem:[#allocation7 + $0x1a4] sm:$0xff]
    %v456 = vld [vmem:[#allocation7 + $0x1ac] sm:$0xf]
    %v457 = vld [vmem:[#allocation7 + $0x1b0] sm:$0xff]
    %v458 = vld [vmem:[#allocation7 + $0x1b8] sm:$0xf]
    %v459 = vld [vmem:[#allocation7 + $0x1bc] sm:$0xff]
    %v460 = vld [vmem:[#allocation7 + $0x1c4] sm:$0xf]
    %v461 = vld [vmem:[#allocation7 + $0x1c8] sm:$0xff]
    %v462 = vld [vmem:[#allocation7 + $0x1d0] sm:$0xf]
    %v463 = vld [vmem:[#allocation7 + $0x1d4] sm:$0xff]
    %v464 = vld [vmem:[#allocation7 + $0x1dc] sm:$0xf]
    %v465 = vld [vmem:[#allocation7 + $0x1e0] sm:$0xff]
    %v466 = vld [vmem:[#allocation7 + $0x1e8] sm:$0xf]
    %v467 = vld [vmem:[#allocation7 + $0x1ec] sm:$0xff]
    %v468 = vld [vmem:[#allocation7 + $0x1f4] sm:$0xf]
    %v469 = vld [vmem:[#allocation7 + $0x1f8] sm:$0xff]
    %v470 = vld [vmem:[#allocation7 + $0x200] sm:$0xf]
    %v471 = vld [vmem:[#allocation7 + $0x204] sm:$0xff]
    %v472 = vld [vmem:[#allocation7 + $0x20c] sm:$0xf]
    %v473 = vld [vmem:[#allocation7 + $0x210] sm:$0xff]
    %v474 = vld [vmem:[#allocation7 + $0x218] sm:$0xf]
    %v475 = vld [vmem:[#allocation7 + $0x21c] sm:$0xff]
    %v476 = vld [vmem:[#allocation7 + $0x224] sm:$0xf]
    %v477 = vld [vmem:[#allocation7 + $0x228] sm:$0xff]
    %v478 = vld [vmem:[#allocation7 + $0x230] sm:$0xf]
    %v479 = vld [vmem:[#allocation7 + $0x234] sm:$0xff]
    %v480 = vld [vmem:[#allocation7 + $0x23c] sm:$0xf]
    %v481 = vld [vmem:[#allocation7 + $0x240] sm:$0xff]
    %v482 = vld [vmem:[#allocation7 + $0x248] sm:$0xf]
    %v483 = vld [vmem:[#allocation7 + $0x24c] sm:$0xff]
    %v484 = vld [vmem:[#allocation7 + $0x254] sm:$0xf]
    %v485 = vld [vmem:[#allocation7 + $0x258] sm:$0xff]
    %v486 = vld [vmem:[#allocation7 + $0x260] sm:$0xf]
    %v487 = vld [vmem:[#allocation7 + $0x264] sm:$0xff]
    %v488 = vld [vmem:[#allocation7 + $0x26c] sm:$0xf]
    %v489 = vld [vmem:[#allocation7 + $0x270] sm:$0xff]
    %v490 = vld [vmem:[#allocation7 + $0x278] sm:$0xf]
    %v491 = vld [vmem:[#allocation7 + $0x27c] sm:$0xff]
    %v492 = vld [vmem:[#allocation7 + $0x284] sm:$0xf]
    %v493 = vld [vmem:[#allocation7 + $0x288] sm:$0xff]
    %v494 = vld [vmem:[#allocation7 + $0x290] sm:$0xf]
    %v495 = vld [vmem:[#allocation7 + $0x294] sm:$0xff]
    %v496 = vld [vmem:[#allocation7 + $0x29c] sm:$0xf]
    %v497 = vld [vmem:[#allocation7 + $0x2a0] sm:$0xff]
    %v498 = vld [vmem:[#allocation7 + $0x2a8] sm:$0xf]
    %v499 = vld [vmem:[#allocation7 + $0x2ac] sm:$0xff]
    %v500 = vld [vmem:[#allocation7 + $0x2b4] sm:$0xf]
    %v501 = vld [vmem:[#allocation7 + $0x2b8] sm:$0xff]
    %v502 = vld [vmem:[#allocation7 + $0x2c0] sm:$0xf]
    %v503 = vld [vmem:[#allocation7 + $0x2c4] sm:$0xff]
    %v504 = vld [vmem:[#allocation7 + $0x2cc] sm:$0xf]
    %v505 = vld [vmem:[#allocation7 + $0x2d0] sm:$0xff]
    %v506 = vld [vmem:[#allocation7 + $0x2d8] sm:$0xf]
    %v507 = vld [vmem:[#allocation7 + $0x2dc] sm:$0xff]
    %v508 = vld [vmem:[#allocation7 + $0x2e4] sm:$0xf]
    %v509 = vld [vmem:[#allocation7 + $0x2e8] sm:$0xff]
    %v510 = vld [vmem:[#allocation7 + $0x2f0] sm:$0xf]
    %v511 = vld [vmem:[#allocation7 + $0x2f4] sm:$0xff]
    %v512 = vld [vmem:[#allocation7 + $0x2fc] sm:$0xf]
    %v641 = vunpack.c.l.b16 %v385
    %v642 = vunpack.c.h.b16 %v385
    %v643 = vunpack.c.l.b16 %v386
    %v644 = vunpack.c.l.b16 %v387
    %v645 = vunpack.c.h.b16 %v387
    %v646 = vunpack.c.l.b16 %v388
    %v647 = vunpack.c.l.b16 %v389
    %v648 = vunpack.c.h.b16 %v389
    %v649 = vunpack.c.l.b16 %v390
    %v650 = vunpack.c.l.b16 %v391
    %v651 = vunpack.c.h.b16 %v391
    %v652 = vunpack.c.l.b16 %v392
    %v653 = vunpack.c.l.b16 %v393
    %v654 = vunpack.c.h.b16 %v393
    %v655 = vunpack.c.l.b16 %v394
    %v656 = vunpack.c.l.b16 %v395
    %v657 = vunpack.c.h.b16 %v395
    %v658 = vunpack.c.l.b16 %v396
    %v659 = vunpack.c.l.b16 %v397
    %v660 = vunpack.c.h.b16 %v397
    %v661 = vunpack.c.l.b16 %v398
    %v662 = vunpack.c.l.b16 %v399
    %v663 = vunpack.c.h.b16 %v399
    %v664 = vunpack.c.l.b16 %v400
    %v665 = vunpack.c.l.b16 %v401
    %v666 = vunpack.c.h.b16 %v401
    %v667 = vunpack.c.l.b16 %v402
    %v668 = vunpack.c.l.b16 %v403
    %v669 = vunpack.c.h.b16 %v403
    %v670 = vunpack.c.l.b16 %v404
    %v671 = vunpack.c.l.b16 %v405
    %v672 = vunpack.c.h.b16 %v405
    %v673 = vunpack.c.l.b16 %v406
    %v674 = vunpack.c.l.b16 %v407
    %v675 = vunpack.c.h.b16 %v407
    %v676 = vunpack.c.l.b16 %v408
    %v677 = vunpack.c.l.b16 %v409
    %v678 = vunpack.c.h.b16 %v409
    %v679 = vunpack.c.l.b16 %v410
    %v680 = vunpack.c.l.b16 %v411
    %v681 = vunpack.c.h.b16 %v411
    %v682 = vunpack.c.l.b16 %v412
    %v683 = vunpack.c.l.b16 %v413
    %v684 = vunpack.c.h.b16 %v413
    %v685 = vunpack.c.l.b16 %v414
    %v686 = vunpack.c.l.b16 %v415
    %v687 = vunpack.c.h.b16 %v415
    %v688 = vunpack.c.l.b16 %v416
    %v689 = vunpack.c.l.b16 %v417
    %v690 = vunpack.c.h.b16 %v417
    %v691 = vunpack.c.l.b16 %v418
    %v692 = vunpack.c.l.b16 %v419
    %v693 = vunpack.c.h.b16 %v419
    %v694 = vunpack.c.l.b16 %v420
    %v695 = vunpack.c.l.b16 %v421
    %v696 = vunpack.c.h.b16 %v421
    %v697 = vunpack.c.l.b16 %v422
    %v698 = vunpack.c.l.b16 %v423
    %v699 = vunpack.c.h.b16 %v423
    %v700 = vunpack.c.l.b16 %v424
    %v701 = vunpack.c.l.b16 %v425
    %v702 = vunpack.c.h.b16 %v425
    %v703 = vunpack.c.l.b16 %v426
    %v704 = vunpack.c.l.b16 %v427
    %v705 = vunpack.c.h.b16 %v427
    %v706 = vunpack.c.l.b16 %v428
    %v707 = vunpack.c.l.b16 %v429
    %v708 = vunpack.c.h.b16 %v429
    %v709 = vunpack.c.l.b16 %v430
    %v710 = vunpack.c.l.b16 %v431
    %v711 = vunpack.c.h.b16 %v431
    %v712 = vunpack.c.l.b16 %v432
    %v713 = vunpack.c.l.b16 %v433
    %v714 = vunpack.c.h.b16 %v433
    %v715 = vunpack.c.l.b16 %v434
    %v716 = vunpack.c.l.b16 %v435
    %v717 = vunpack.c.h.b16 %v435
    %v718 = vunpack.c.l.b16 %v436
    %v719 = vunpack.c.l.b16 %v437
    %v720 = vunpack.c.h.b16 %v437
    %v721 = vunpack.c.l.b16 %v438
    %v722 = vunpack.c.l.b16 %v439
    %v723 = vunpack.c.h.b16 %v439
    %v724 = vunpack.c.l.b16 %v440
    %v725 = vunpack.c.l.b16 %v441
    %v726 = vunpack.c.h.b16 %v441
    %v727 = vunpack.c.l.b16 %v442
    %v728 = vunpack.c.l.b16 %v443
    %v729 = vunpack.c.h.b16 %v443
    %v730 = vunpack.c.l.b16 %v444
    %v731 = vunpack.c.l.b16 %v445
    %v732 = vunpack.c.h.b16 %v445
    %v733 = vunpack.c.l.b16 %v446
    %v734 = vunpack.c.l.b16 %v447
    %v735 = vunpack.c.h.b16 %v447
    %v736 = vunpack.c.l.b16 %v448
    %v737 = vunpack.c.l.b16 %v449
    %v738 = vunpack.c.h.b16 %v449
    %v739 = vunpack.c.l.b16 %v450
    %v740 = vunpack.c.l.b16 %v451
    %v741 = vunpack.c.h.b16 %v451
    %v742 = vunpack.c.l.b16 %v452
    %v743 = vunpack.c.l.b16 %v453
    %v744 = vunpack.c.h.b16 %v453
    %v745 = vunpack.c.l.b16 %v454
    %v746 = vunpack.c.l.b16 %v455
    %v747 = vunpack.c.h.b16 %v455
    %v748 = vunpack.c.l.b16 %v456
    %v749 = vunpack.c.l.b16 %v457
    %v750 = vunpack.c.h.b16 %v457
    %v751 = vunpack.c.l.b16 %v458
    %v752 = vunpack.c.l.b16 %v459
    %v753 = vunpack.c.h.b16 %v459
    %v754 = vunpack.c.l.b16 %v460
    %v755 = vunpack.c.l.b16 %v461
    %v756 = vunpack.c.h.b16 %v461
    %v757 = vunpack.c.l.b16 %v462
    %v758 = vunpack.c.l.b16 %v463
    %v759 = vunpack.c.h.b16 %v463
    %v760 = vunpack.c.l.b16 %v464
    %v761 = vunpack.c.l.b16 %v465
    %v762 = vunpack.c.h.b16 %v465
    %v763 = vunpack.c.l.b16 %v466
    %v764 = vunpack.c.l.b16 %v467
    %v765 = vunpack.c.h.b16 %v467
    %v766 = vunpack.c.l.b16 %v468
    %v767 = vunpack.c.l.b16 %v469
    %v768 = vunpack.c.h.b16 %v469
    %v769 = vunpack.c.l.b16 %v470
    %v770 = vunpack.c.l.b16 %v471
    %v771 = vunpack.c.h.b16 %v471
    %v772 = vunpack.c.l.b16 %v472
    %v773 = vunpack.c.l.b16 %v473
    %v774 = vunpack.c.h.b16 %v473
    %v775 = vunpack.c.l.b16 %v474
    %v776 = vunpack.c.l.b16 %v475
    %v777 = vunpack.c.h.b16 %v475
    %v778 = vunpack.c.l.b16 %v476
    %v779 = vunpack.c.l.b16 %v477
    %v780 = vunpack.c.h.b16 %v477
    %v781 = vunpack.c.l.b16 %v478
    %v782 = vunpack.c.l.b16 %v479
    %v783 = vunpack.c.h.b16 %v479
    %v784 = vunpack.c.l.b16 %v480
    %v785 = vunpack.c.l.b16 %v481
    %v786 = vunpack.c.h.b16 %v481
    %v787 = vunpack.c.l.b16 %v482
    %v788 = vunpack.c.l.b16 %v483
    %v789 = vunpack.c.h.b16 %v483
    %v790 = vunpack.c.l.b16 %v484
    %v791 = vunpack.c.l.b16 %v485
    %v792 = vunpack.c.h.b16 %v485
    %v793 = vunpack.c.l.b16 %v486
    %v794 = vunpack.c.l.b16 %v487
    %v795 = vunpack.c.h.b16 %v487
    %v796 = vunpack.c.l.b16 %v488
    %v797 = vunpack.c.l.b16 %v489
    %v798 = vunpack.c.h.b16 %v489
    %v799 = vunpack.c.l.b16 %v490
    %v800 = vunpack.c.l.b16 %v491
    %v801 = vunpack.c.h.b16 %v491
    %v802 = vunpack.c.l.b16 %v492
    %v803 = vunpack.c.l.b16 %v493
    %v804 = vunpack.c.h.b16 %v493
    %v805 = vunpack.c.l.b16 %v494
    %v806 = vunpack.c.l.b16 %v495
    %v807 = vunpack.c.h.b16 %v495
    %v808 = vunpack.c.l.b16 %v496
    %v809 = vunpack.c.l.b16 %v497
    %v810 = vunpack.c.h.b16 %v497
    %v811 = vunpack.c.l.b16 %v498
    %v812 = vunpack.c.l.b16 %v499
    %v813 = vunpack.c.h.b16 %v499
    %v814 = vunpack.c.l.b16 %v500
    %v815 = vunpack.c.l.b16 %v501
    %v816 = vunpack.c.h.b16 %v501
    %v817 = vunpack.c.l.b16 %v502
    %v818 = vunpack.c.l.b16 %v503
    %v819 = vunpack.c.h.b16 %v503
    %v820 = vunpack.c.l.b16 %v504
    %v821 = vunpack.c.l.b16 %v505
    %v822 = vunpack.c.h.b16 %v505
    %v823 = vunpack.c.l.b16 %v506
    %v824 = vunpack.c.l.b16 %v507
    %v825 = vunpack.c.h.b16 %v507
    %v826 = vunpack.c.l.b16 %v508
    %v827 = vunpack.c.l.b16 %v509
    %v828 = vunpack.c.h.b16 %v509
    %v829 = vunpack.c.l.b16 %v510
    %v830 = vunpack.c.l.b16 %v511
    %v831 = vunpack.c.h.b16 %v511
    %v832 = vunpack.c.l.b16 %v512
    %v833 = vpack.c.b16 %v644, %v641
    %v834 = vpack.c.b16 %v645, %v642
    %v835 = vpack.c.b16 %v646, %v643
    %v836 = vpack.c.b16 %v650, %v647
    %v837 = vpack.c.b16 %v651, %v648
    %v838 = vpack.c.b16 %v652, %v649
    %v839 = vpack.c.b16 %v656, %v653
    %v840 = vpack.c.b16 %v657, %v654
    %v841 = vpack.c.b16 %v658, %v655
    %v842 = vpack.c.b16 %v662, %v659
    %v843 = vpack.c.b16 %v663, %v660
    %v844 = vpack.c.b16 %v664, %v661
    %v845 = vpack.c.b16 %v668, %v665
    %v846 = vpack.c.b16 %v669, %v666
    %v847 = vpack.c.b16 %v670, %v667
    %v848 = vpack.c.b16 %v674, %v671
    %v849 = vpack.c.b16 %v675, %v672
    %v850 = vpack.c.b16 %v676, %v673
    %v851 = vpack.c.b16 %v680, %v677
    %v852 = vpack.c.b16 %v681, %v678
    %v853 = vpack.c.b16 %v682, %v679
    %v854 = vpack.c.b16 %v686, %v683
    %v855 = vpack.c.b16 %v687, %v684
    %v856 = vpack.c.b16 %v688, %v685
    %v857 = vpack.c.b16 %v692, %v689
    %v858 = vpack.c.b16 %v693, %v690
    %v859 = vpack.c.b16 %v694, %v691
    %v860 = vpack.c.b16 %v698, %v695
    %v861 = vpack.c.b16 %v699, %v696
    %v862 = vpack.c.b16 %v700, %v697
    %v863 = vpack.c.b16 %v704, %v701
    %v864 = vpack.c.b16 %v705, %v702
    %v865 = vpack.c.b16 %v706, %v703
    %v866 = vpack.c.b16 %v710, %v707
    %v867 = vpack.c.b16 %v711, %v708
    %v868 = vpack.c.b16 %v712, %v709
    %v869 = vpack.c.b16 %v716, %v713
    %v870 = vpack.c.b16 %v717, %v714
    %v871 = vpack.c.b16 %v718, %v715
    %v872 = vpack.c.b16 %v722, %v719
    %v873 = vpack.c.b16 %v723, %v720
    %v874 = vpack.c.b16 %v724, %v721
    %v875 = vpack.c.b16 %v728, %v725
    %v876 = vpack.c.b16 %v729, %v726
    %v877 = vpack.c.b16 %v730, %v727
    %v878 = vpack.c.b16 %v734, %v731
    %v879 = vpack.c.b16 %v735, %v732
    %v880 = vpack.c.b16 %v736, %v733
    %v881 = vpack.c.b16 %v740, %v737
    %v882 = vpack.c.b16 %v741, %v738
    %v883 = vpack.c.b16 %v742, %v739
    %v884 = vpack.c.b16 %v746, %v743
    %v885 = vpack.c.b16 %v747, %v744
    %v886 = vpack.c.b16 %v748, %v745
    %v887 = vpack.c.b16 %v752, %v749
    %v888 = vpack.c.b16 %v753, %v750
    %v889 = vpack.c.b16 %v754, %v751
    %v890 = vpack.c.b16 %v758, %v755
    %v891 = vpack.c.b16 %v759, %v756
    %v892 = vpack.c.b16 %v760, %v757
    %v893 = vpack.c.b16 %v764, %v761
    %v894 = vpack.c.b16 %v765, %v762
    %v895 = vpack.c.b16 %v766, %v763
    %v896 = vpack.c.b16 %v770, %v767
    %v897 = vpack.c.b16 %v771, %v768
    %v898 = vpack.c.b16 %v772, %v769
    %v899 = vpack.c.b16 %v776, %v773
    %v900 = vpack.c.b16 %v777, %v774
    %v901 = vpack.c.b16 %v778, %v775
    %v902 = vpack.c.b16 %v782, %v779
    %v903 = vpack.c.b16 %v783, %v780
    %v904 = vpack.c.b16 %v784, %v781
    %v905 = vpack.c.b16 %v788, %v785
    %v906 = vpack.c.b16 %v789, %v786
    %v907 = vpack.c.b16 %v790, %v787
    %v908 = vpack.c.b16 %v794, %v791
    %v909 = vpack.c.b16 %v795, %v792
    %v910 = vpack.c.b16 %v796, %v793
    %v911 = vpack.c.b16 %v800, %v797
    %v912 = vpack.c.b16 %v801, %v798
    %v913 = vpack.c.b16 %v802, %v799
    %v914 = vpack.c.b16 %v806, %v803
    %v915 = vpack.c.b16 %v807, %v804
    %v916 = vpack.c.b16 %v808, %v805
    %v917 = vpack.c.b16 %v812, %v809
    %v918 = vpack.c.b16 %v813, %v810
    %v919 = vpack.c.b16 %v814, %v811
    %v920 = vpack.c.b16 %v818, %v815
    %v921 = vpack.c.b16 %v819, %v816
    %v922 = vpack.c.b16 %v820, %v817
    %v923 = vpack.c.b16 %v824, %v821
    %v924 = vpack.c.b16 %v825, %v822
    %v925 = vpack.c.b16 %v826, %v823
    %v926 = vpack.c.b16 %v830, %v827
    %v927 = vpack.c.b16 %v831, %v828
    %v928 = vpack.c.b16 %v832, %v829
    %1025 = vmatprep.subr.bf16.mxu0 %v834
    %1026 = vmatpush1.bf16.msra.mxu0 %v833
    %1027 = vmatprep.subr.bf16.mxu0 %v837
    %1028 = vmatpush1.bf16.msra.mxu0 %v836
    %1029 = vmatprep.subr.bf16.mxu0 %v840
    %1030 = vmatpush1.bf16.msra.mxu0 %v839
    %1031 = vmatprep.subr.bf16.mxu0 %v843
    %1032 = vmatpush1.bf16.msra.mxu0 %v842
    %1033 = vmatprep.subr.bf16.mxu0 %v846
    %1034 = vmatpush1.bf16.msra.mxu0 %v845
    %1035 = vmatprep.subr.bf16.mxu0 %v849
    %1036 = vmatpush1.bf16.msra.mxu0 %v848
    %1037 = vmatprep.subr.bf16.mxu0 %v852
    %1038 = vmatpush1.bf16.msra.mxu0 %v851
    %1039 = vmatprep.subr.bf16.mxu0 %v855
    %1040 = vmatpush1.bf16.msra.mxu0 %v854
    %1041 = vmatprep.subr.bf16.mxu0 %v858
    %1042 = vmatpush1.bf16.msra.mxu0 %v857
    %1043 = vmatprep.subr.bf16.mxu0 %v861
    %1044 = vmatpush1.bf16.msra.mxu0 %v860
    %1045 = vmatprep.subr.bf16.mxu0 %v864
    %1046 = vmatpush1.bf16.msra.mxu0 %v863
    %1047 = vmatprep.subr.bf16.mxu0 %v867
    %1048 = vmatpush1.bf16.msra.mxu0 %v866
    %1049 = vmatprep.subr.bf16.mxu0 %v870
    %1050 = vmatpush1.bf16.msra.mxu0 %v869
    %1051 = vmatprep.subr.bf16.mxu0 %v873
    %1052 = vmatpush1.bf16.msra.mxu0 %v872
    %1053 = vmatprep.subr.bf16.mxu0 %v876
    %1054 = vmatpush1.bf16.msra.mxu0 %v875
    %1055 = vmatprep.subr.bf16.mxu0 %v879
    %1056 = vmatpush1.bf16.msra.mxu0 %v878
    %1057 = vmatprep.mubr.bf16.mxu0 %v382
    %1058 = vmatmul.mubr.bf16.gmra.mrb[0].mxu0 %v381
    %v1059 = vpop.f32.mrb[0].mxu0
    %v1060 = vadd.f32 0.0, %v1059
    %v1061 = vpop.f32.mrb[0].mxu0
    %v1062 = vadd.f32 0.0, %v1061
    %v1063 = vpop.f32.mrb[0].mxu0
    %v1064 = vpop.f32.mrb[0].mxu0
    %1065 = vdwg.mxu0
    %1066 = vmatprep.subr.bf16.mxu0 %v882
    %1067 = vmatpush1.bf16.msra.mxu0 %v881
    %1068 = vmatprep.subr.bf16.mxu0 %v885
    %1069 = vmatpush1.bf16.msra.mxu0 %v884
    %1070 = vmatprep.subr.bf16.mxu0 %v888
    %1071 = vmatpush1.bf16.msra.mxu0 %v887
    %1072 = vmatprep.subr.bf16.mxu0 %v891
    %1073 = vmatpush1.bf16.msra.mxu0 %v890
    %1074 = vmatprep.subr.bf16.mxu0 %v894
    %1075 = vmatpush1.bf16.msra.mxu0 %v893
    %1076 = vmatprep.subr.bf16.mxu0 %v897
    %1077 = vmatpush1.bf16.msra.mxu0 %v896
    %1078 = vmatprep.subr.bf16.mxu0 %v900
    %1079 = vmatpush1.bf16.msra.mxu0 %v899
    %1080 = vmatprep.subr.bf16.mxu0 %v903
    %1081 = vmatpush1.bf16.msra.mxu0 %v902
    %1082 = vmatprep.subr.bf16.mxu0 %v906
    %1083 = vmatpush1.bf16.msra.mxu0 %v905
    %1084 = vmatprep.subr.bf16.mxu0 %v909
    %1085 = vmatpush1.bf16.msra.mxu0 %v908
    %1086 = vmatprep.subr.bf16.mxu0 %v912
    %1087 = vmatpush1.bf16.msra.mxu0 %v911
    %1088 = vmatprep.subr.bf16.mxu0 %v915
    %1089 = vmatpush1.bf16.msra.mxu0 %v914
    %1090 = vmatprep.subr.bf16.mxu0 %v918
    %1091 = vmatpush1.bf16.msra.mxu0 %v917
    %1092 = vmatprep.subr.bf16.mxu0 %v921
    %1093 = vmatpush1.bf16.msra.mxu0 %v920
    %1094 = vmatprep.subr.bf16.mxu0 %v924
    %1095 = vmatpush1.bf16.msra.mxu0 %v923
    %1096 = vmatprep.subr.bf16.mxu0 %v927
    %1097 = vmatpush1.bf16.msra.mxu0 %v926
    %1098 = vmatprep.mubr.bf16.mxu0 %v384
    %1099 = vmatmul.mubr.bf16.gmra.mrb[0].mxu0 %v383
    %v1100 = vpop.f32.mrb[0].mxu0
    %v1101 = vadd.f32 %v1060, %v1100
    %v1102 = vpop.f32.mrb[0].mxu0
    %v1103 = vadd.f32 %v1062, %v1102
    %v1104 = vpop.f32.mrb[0].mxu0
    %v1105 = vpop.f32.mrb[0].mxu0
    %1106 = vdwg.mxu0
    %1107 = vmatprep.subr.bf16.mxu0 0
    %1108 = vmatpush1.bf16.msra.mxu0 %v835
    %1109 = vmatprep.subr.bf16.mxu0 0
    %1110 = vmatpush1.bf16.msra.mxu0 %v838
    %1111 = vmatprep.subr.bf16.mxu0 0
    %1112 = vmatpush1.bf16.msra.mxu0 %v841
    %1113 = vmatprep.subr.bf16.mxu0 0
    %1114 = vmatpush1.bf16.msra.mxu0 %v844
    %1115 = vmatprep.subr.bf16.mxu0 0
    %1116 = vmatpush1.bf16.msra.mxu0 %v847
    %1117 = vmatprep.subr.bf16.mxu0 0
    %1118 = vmatpush1.bf16.msra.mxu0 %v850
    %1119 = vmatprep.subr.bf16.mxu0 0
    %1120 = vmatpush1.bf16.msra.mxu0 %v853
    %1121 = vmatprep.subr.bf16.mxu0 0
    %1122 = vmatpush1.bf16.msra.mxu0 %v856
    %1123 = vmatprep.subr.bf16.mxu0 0
    %1124 = vmatpush1.bf16.msra.mxu0 %v859
    %1125 = vmatprep.subr.bf16.mxu0 0
    %1126 = vmatpush1.bf16.msra.mxu0 %v862
    %1127 = vmatprep.subr.bf16.mxu0 0
    %1128 = vmatpush1.bf16.msra.mxu0 %v865
    %1129 = vmatprep.subr.bf16.mxu0 0
    %1130 = vmatpush1.bf16.msra.mxu0 %v868
    %1131 = vmatprep.subr.bf16.mxu0 0
    %1132 = vmatpush1.bf16.msra.mxu0 %v871
    %1133 = vmatprep.subr.bf16.mxu0 0
    %1134 = vmatpush1.bf16.msra.mxu0 %v874
    %1135 = vmatprep.subr.bf16.mxu0 0
    %1136 = vmatpush1.bf16.msra.mxu0 %v877
    %1137 = vmatprep.subr.bf16.mxu0 0
    %1138 = vmatpush1.bf16.msra.mxu0 %v880
    %1139 = vmatprep.mubr.bf16.mxu0 %v382
    %1140 = vmatmul.mubr.bf16.gmra.mrb[0].mxu0 %v381
    %v1141 = vpop.f32.mrb[0].mxu0
    %v1142 = vadd.f32 0.0, %v1141
    %v1143 = vpop.f32.mrb[0].mxu0
    %v1144 = vpop.f32.mrb[0].mxu0
    %v1145 = vpop.f32.mrb[0].mxu0
    %1146 = vdwg.mxu0
    %1147 = vmatprep.subr.bf16.mxu0 0
    %1148 = vmatpush1.bf16.msra.mxu0 %v883
    %1149 = vmatprep.subr.bf16.mxu0 0
    %1150 = vmatpush1.bf16.msra.mxu0 %v886
    %1151 = vmatprep.subr.bf16.mxu0 0
    %1152 = vmatpush1.bf16.msra.mxu0 %v889
    %1153 = vmatprep.subr.bf16.mxu0 0
    %1154 = vmatpush1.bf16.msra.mxu0 %v892
    %1155 = vmatprep.subr.bf16.mxu0 0
    %1156 = vmatpush1.bf16.msra.mxu0 %v895
    %1157 = vmatprep.subr.bf16.mxu0 0
    %1158 = vmatpush1.bf16.msra.mxu0 %v898
    %1159 = vmatprep.subr.bf16.mxu0 0
    %1160 = vmatpush1.bf16.msra.mxu0 %v901
    %1161 = vmatprep.subr.bf16.mxu0 0
    %1162 = vmatpush1.bf16.msra.mxu0 %v904
    %1163 = vmatprep.subr.bf16.mxu0 0
    %1164 = vmatpush1.bf16.msra.mxu0 %v907
    %1165 = vmatprep.subr.bf16.mxu0 0
    %1166 = vmatpush1.bf16.msra.mxu0 %v910
    %1167 = vmatprep.subr.bf16.mxu0 0
    %1168 = vmatpush1.bf16.msra.mxu0 %v913
    %1169 = vmatprep.subr.bf16.mxu0 0
    %1170 = vmatpush1.bf16.msra.mxu0 %v916
    %1171 = vmatprep.subr.bf16.mxu0 0
    %1172 = vmatpush1.bf16.msra.mxu0 %v919
    %1173 = vmatprep.subr.bf16.mxu0 0
    %1174 = vmatpush1.bf16.msra.mxu0 %v922
    %1175 = vmatprep.subr.bf16.mxu0 0
    %1176 = vmatpush1.bf16.msra.mxu0 %v925
    %1177 = vmatprep.subr.bf16.mxu0 0
    %1178 = vmatpush1.bf16.msra.mxu0 %v928
    %1179 = vmatprep.mubr.bf16.mxu0 %v384
    %1180 = vmatmul.mubr.bf16.gmra.mrb[0].mxu0 %v383
    %v1181 = vpop.f32.mrb[0].mxu0
    %v1182 = vadd.f32 %v1142, %v1181
    %v1183 = vpop.f32.mrb[0].mxu0
    %v1184 = vpop.f32.mrb[0].mxu0
    %v1185 = vpop.f32.mrb[0].mxu0
    %1186 = vdwg.mxu0
    %v1187 = vmax.f32 %v1101, 0.0
    %v1188 = vmax.f32 %v1103, 0.0
    %v1189 = vmax.f32 %v1182, 0.0
    %vm1190 = vcmp.eq.s32.totalorder %v369, 300
    %vm1191 = vcmp.eq.s32.totalorder %v370, 300
    %vm1192 = vcmp.eq.s32.totalorder %v371, 300
    %v1193 = vsel %vm1190, 1.0, %v1187
    %v1194 = vsel %vm1191, 1.0, %v1188
    %v1195 = vsel %vm1192, 1.0, %v1189
    %v1196 = vpack.c.bf16 %v1193, %v1193
    %v1197 = vpack.c.bf16 %v1194, %v1194
    %v1198 = vpack.c.bf16 %v1195, %v1195
    %v1199 = vld [vmem:[#allocation8] sm:$0xff]
    %v1200 = vld [vmem:[#allocation8 + $0x8] sm:$0xff]
    %v1201 = vld [vmem:[#allocation8 + $0x10] sm:$0xff]
    %v1202 = vld [vmem:[#allocation8 + $0x18] sm:$0xff]
    %v1203 = vld [vmem:[#allocation8 + $0x20] sm:$0xff]
    %v1204 = vld [vmem:[#allocation8 + $0x28] sm:$0xff]
    %v1205 = vld [vmem:[#allocation8 + $0x30] sm:$0xff]
    %v1206 = vld [vmem:[#allocation8 + $0x38] sm:$0xff]
    %v1207 = vld [vmem:[#allocation8 + $0x40] sm:$0xff]
    %v1208 = vld [vmem:[#allocation8 + $0x48] sm:$0xff]
    %v1209 = vld [vmem:[#allocation8 + $0x50] sm:$0xff]
    %v1210 = vld [vmem:[#allocation8 + $0x58] sm:$0xff]
    %v1211 = vld [vmem:[#allocation8 + $0x60] sm:$0xff]
    %v1212 = vld [vmem:[#allocation8 + $0x68] sm:$0xff]
    %v1213 = vld [vmem:[#allocation8 + $0x70] sm:$0xff]
    %v1214 = vld [vmem:[#allocation8 + $0x78] sm:$0xff]
    %v1215 = vld [vmem:[#allocation8 + $0x80] sm:$0xff]
    %v1216 = vld [vmem:[#allocation8 + $0x88] sm:$0xff]
    %v1217 = vld [vmem:[#allocation8 + $0x90] sm:$0xff]
    %v1218 = vld [vmem:[#allocation8 + $0x98] sm:$0xff]
    %v1219 = vld [vmem:[#allocation8 + $0xa0] sm:$0xff]
    %v1220 = vld [vmem:[#allocation8 + $0xa8] sm:$0xff]
    %v1221 = vld [vmem:[#allocation8 + $0xb0] sm:$0xff]
    %v1222 = vld [vmem:[#allocation8 + $0xb8] sm:$0xff]
    %v1223 = vld [vmem:[#allocation8 + $0xc0] sm:$0xff]
    %v1224 = vld [vmem:[#allocation8 + $0xc8] sm:$0xff]
    %v1225 = vld [vmem:[#allocation8 + $0xd0] sm:$0xff]
    %v1226 = vld [vmem:[#allocation8 + $0xd8] sm:$0xff]
    %v1227 = vld [vmem:[#allocation8 + $0xe0] sm:$0xff]
    %v1228 = vld [vmem:[#allocation8 + $0xe8] sm:$0xff]
    %v1229 = vld [vmem:[#allocation8 + $0xf0] sm:$0xff]
    %v1230 = vld [vmem:[#allocation8 + $0xf8] sm:$0xff]
    %v1231 = vld [vmem:[#allocation8 + $0x100] sm:$0xff]
    %v1232 = vld [vmem:[#allocation8 + $0x108] sm:$0xff]
    %v1233 = vld [vmem:[#allocation8 + $0x110] sm:$0xff]
    %v1234 = vld [vmem:[#allocation8 + $0x118] sm:$0xff]
    %v1235 = vld [vmem:[#allocation8 + $0x120] sm:$0xff]
    %v1236 = vld [vmem:[#allocation8 + $0x128] sm:$0xff]
    %v1237 = vld [vmem:[#allocation8 + $0x130] sm:$0xff]
    %v1238 = vld [vmem:[#allocation8 + $0x138] sm:$0xff]
    %v1239 = vld [vmem:[#allocation8 + $0x140] sm:$0xff]
    %v1240 = vld [vmem:[#allocation8 + $0x148] sm:$0xff]
    %v1241 = vld [vmem:[#allocation8 + $0x150] sm:$0xff]
    %v1242 = vld [vmem:[#allocation8 + $0x158] sm:$0xff]
    %v1243 = vld [vmem:[#allocation8 + $0x160] sm:$0xff]
    %v1244 = vld [vmem:[#allocation8 + $0x168] sm:$0xff]
    %v1245 = vld [vmem:[#allocation8 + $0x170] sm:$0xff]
    %v1246 = vld [vmem:[#allocation8 + $0x178] sm:$0xff]
    %v1295 = vunpack.c.l.b16 %v1199
    %v1296 = vunpack.c.h.b16 %v1199
    %v1297 = vunpack.c.l.b16 %v1200
    %v1298 = vunpack.c.h.b16 %v1200
    %v1299 = vunpack.c.l.b16 %v1201
    %v1300 = vunpack.c.h.b16 %v1201
    %v1301 = vunpack.c.l.b16 %v1202
    %v1302 = vunpack.c.h.b16 %v1202
    %v1303 = vunpack.c.l.b16 %v1203
    %v1304 = vunpack.c.h.b16 %v1203
    %v1305 = vunpack.c.l.b16 %v1204
    %v1306 = vunpack.c.h.b16 %v1204
    %v1307 = vunpack.c.l.b16 %v1205
    %v1308 = vunpack.c.h.b16 %v1205
    %v1309 = vunpack.c.l.b16 %v1206
    %v1310 = vunpack.c.h.b16 %v1206
    %v1311 = vunpack.c.l.b16 %v1207
    %v1312 = vunpack.c.h.b16 %v1207
    %v1313 = vunpack.c.l.b16 %v1208
    %v1314 = vunpack.c.h.b16 %v1208
    %v1315 = vunpack.c.l.b16 %v1209
    %v1316 = vunpack.c.h.b16 %v1209
    %v1317 = vunpack.c.l.b16 %v1210
    %v1318 = vunpack.c.h.b16 %v1210
    %v1319 = vunpack.c.l.b16 %v1211
    %v1320 = vunpack.c.h.b16 %v1211
    %v1321 = vunpack.c.l.b16 %v1212
    %v1322 = vunpack.c.h.b16 %v1212
    %v1323 = vunpack.c.l.b16 %v1213
    %v1324 = vunpack.c.h.b16 %v1213
    %v1325 = vunpack.c.l.b16 %v1214
    %v1326 = vunpack.c.h.b16 %v1214
    %v1327 = vunpack.c.l.b16 %v1215
    %v1328 = vunpack.c.h.b16 %v1215
    %v1329 = vunpack.c.l.b16 %v1216
    %v1330 = vunpack.c.h.b16 %v1216
    %v1331 = vunpack.c.l.b16 %v1217
    %v1332 = vunpack.c.h.b16 %v1217
    %v1333 = vunpack.c.l.b16 %v1218
    %v1334 = vunpack.c.h.b16 %v1218
    %v1335 = vunpack.c.l.b16 %v1219
    %v1336 = vunpack.c.h.b16 %v1219
    %v1337 = vunpack.c.l.b16 %v1220
    %v1338 = vunpack.c.h.b16 %v1220
    %v1339 = vunpack.c.l.b16 %v1221
    %v1340 = vunpack.c.h.b16 %v1221
    %v1341 = vunpack.c.l.b16 %v1222
    %v1342 = vunpack.c.h.b16 %v1222
    %v1343 = vunpack.c.l.b16 %v1223
    %v1344 = vunpack.c.h.b16 %v1223
    %v1345 = vunpack.c.l.b16 %v1224
    %v1346 = vunpack.c.h.b16 %v1224
    %v1347 = vunpack.c.l.b16 %v1225
    %v1348 = vunpack.c.h.b16 %v1225
    %v1349 = vunpack.c.l.b16 %v1226
    %v1350 = vunpack.c.h.b16 %v1226
    %v1351 = vunpack.c.l.b16 %v1227
    %v1352 = vunpack.c.h.b16 %v1227
    %v1353 = vunpack.c.l.b16 %v1228
    %v1354 = vunpack.c.h.b16 %v1228
    %v1355 = vunpack.c.l.b16 %v1229
    %v1356 = vunpack.c.h.b16 %v1229
    %v1357 = vunpack.c.l.b16 %v1230
    %v1358 = vunpack.c.h.b16 %v1230
    %v1359 = vunpack.c.l.b16 %v1231
    %v1360 = vunpack.c.h.b16 %v1231
    %v1361 = vunpack.c.l.b16 %v1232
    %v1362 = vunpack.c.h.b16 %v1232
    %v1363 = vunpack.c.l.b16 %v1233
    %v1364 = vunpack.c.h.b16 %v1233
    %v1365 = vunpack.c.l.b16 %v1234
    %v1366 = vunpack.c.h.b16 %v1234
    %v1367 = vunpack.c.l.b16 %v1235
    %v1368 = vunpack.c.h.b16 %v1235
    %v1369 = vunpack.c.l.b16 %v1236
    %v1370 = vunpack.c.h.b16 %v1236
    %v1371 = vunpack.c.l.b16 %v1237
    %v1372 = vunpack.c.h.b16 %v1237
    %v1373 = vunpack.c.l.b16 %v1238
    %v1374 = vunpack.c.h.b16 %v1238
    %v1375 = vunpack.c.l.b16 %v1239
    %v1376 = vunpack.c.h.b16 %v1239
    %v1377 = vunpack.c.l.b16 %v1240
    %v1378 = vunpack.c.h.b16 %v1240
    %v1379 = vunpack.c.l.b16 %v1241
    %v1380 = vunpack.c.h.b16 %v1241
    %v1381 = vunpack.c.l.b16 %v1242
    %v1382 = vunpack.c.h.b16 %v1242
    %v1383 = vunpack.c.l.b16 %v1243
    %v1384 = vunpack.c.h.b16 %v1243
    %v1385 = vunpack.c.l.b16 %v1244
    %v1386 = vunpack.c.h.b16 %v1244
    %v1387 = vunpack.c.l.b16 %v1245
    %v1388 = vunpack.c.h.b16 %v1245
    %v1389 = vunpack.c.l.b16 %v1246
    %v1390 = vunpack.c.h.b16 %v1246
    %v1391 = vpack.c.b16 %v1297, %v1295
    %v1392 = vpack.c.b16 %v1298, %v1296
    %v1393 = vpack.c.b16 %v1301, %v1299
    %v1394 = vpack.c.b16 %v1302, %v1300
    %v1395 = vpack.c.b16 %v1305, %v1303
    %v1396 = vpack.c.b16 %v1306, %v1304
    %v1397 = vpack.c.b16 %v1309, %v1307
    %v1398 = vpack.c.b16 %v1310, %v1308
    %v1399 = vpack.c.b16 %v1313, %v1311
    %v1400 = vpack.c.b16 %v1314, %v1312
    %v1401 = vpack.c.b16 %v1317, %v1315
    %v1402 = vpack.c.b16 %v1318, %v1316
    %v1403 = vpack.c.b16 %v1321, %v1319
    %v1404 = vpack.c.b16 %v1322, %v1320
    %v1405 = vpack.c.b16 %v1325, %v1323
    %v1406 = vpack.c.b16 %v1326, %v1324
    %v1407 = vpack.c.b16 %v1329, %v1327
    %v1408 = vpack.c.b16 %v1330, %v1328
    %v1409 = vpack.c.b16 %v1333, %v1331
    %v1410 = vpack.c.b16 %v1334, %v1332
    %v1411 = vpack.c.b16 %v1337, %v1335
    %v1412 = vpack.c.b16 %v1338, %v1336
    %v1413 = vpack.c.b16 %v1341, %v1339
    %v1414 = vpack.c.b16 %v1342, %v1340
    %v1415 = vpack.c.b16 %v1345, %v1343
    %v1416 = vpack.c.b16 %v1346, %v1344
    %v1417 = vpack.c.b16 %v1349, %v1347
    %v1418 = vpack.c.b16 %v1350, %v1348
    %v1419 = vpack.c.b16 %v1353, %v1351
    %v1420 = vpack.c.b16 %v1354, %v1352
    %v1421 = vpack.c.b16 %v1357, %v1355
    %v1422 = vpack.c.b16 %v1358, %v1356
    %v1423 = vpack.c.b16 %v1361, %v1359
    %v1424 = vpack.c.b16 %v1362, %v1360
    %v1425 = vpack.c.b16 %v1365, %v1363
    %v1426 = vpack.c.b16 %v1366, %v1364
    %v1427 = vpack.c.b16 %v1369, %v1367
    %v1428 = vpack.c.b16 %v1370, %v1368
    %v1429 = vpack.c.b16 %v1373, %v1371
    %v1430 = vpack.c.b16 %v1374, %v1372
    %v1431 = vpack.c.b16 %v1377, %v1375
    %v1432 = vpack.c.b16 %v1378, %v1376
    %v1433 = vpack.c.b16 %v1381, %v1379
    %v1434 = vpack.c.b16 %v1382, %v1380
    %v1435 = vpack.c.b16 %v1385, %v1383
    %v1436 = vpack.c.b16 %v1386, %v1384
    %v1437 = vpack.c.b16 %v1389, %v1387
    %v1438 = vpack.c.b16 %v1390, %v1388
    %1487 = vmatprep.subr.bf16.mxu0 %v1392
    %1488 = vmatpush1.bf16.msra.mxu0 %v1391
    %1489 = vmatprep.subr.bf16.mxu0 %v1394
    %1490 = vmatpush1.bf16.msra.mxu0 %v1393
    %1491 = vmatprep.subr.bf16.mxu0 %v1396
    %1492 = vmatpush1.bf16.msra.mxu0 %v1395
    %1493 = vmatprep.subr.bf16.mxu0 %v1398
    %1494 = vmatpush1.bf16.msra.mxu0 %v1397
    %1495 = vmatprep.subr.bf16.mxu0 %v1400
    %1496 = vmatpush1.bf16.msra.mxu0 %v1399
    %1497 = vmatprep.subr.bf16.mxu0 %v1402
    %1498 = vmatpush1.bf16.msra.mxu0 %v1401
    %1499 = vmatprep.subr.bf16.mxu0 %v1404
    %1500 = vmatpush1.bf16.msra.mxu0 %v1403
    %1501 = vmatprep.subr.bf16.mxu0 %v1406
    %1502 = vmatpush1.bf16.msra.mxu0 %v1405
    %1503 = vmatprep.subr.bf16.mxu0 %v1408
    %1504 = vmatpush1.bf16.msra.mxu0 %v1407
    %1505 = vmatprep.subr.bf16.mxu0 %v1410
    %1506 = vmatpush1.bf16.msra.mxu0 %v1409
    %1507 = vmatprep.subr.bf16.mxu0 %v1412
    %1508 = vmatpush1.bf16.msra.mxu0 %v1411
    %1509 = vmatprep.subr.bf16.mxu0 %v1414
    %1510 = vmatpush1.bf16.msra.mxu0 %v1413
    %1511 = vmatprep.subr.bf16.mxu0 %v1416
    %1512 = vmatpush1.bf16.msra.mxu0 %v1415
    %1513 = vmatprep.subr.bf16.mxu0 %v1418
    %1514 = vmatpush1.bf16.msra.mxu0 %v1417
    %1515 = vmatprep.subr.bf16.mxu0 %v1420
    %1516 = vmatpush1.bf16.msra.mxu0 %v1419
    %1517 = vmatprep.subr.bf16.mxu0 %v1422
    %1518 = vmatpush1.bf16.msra.mxu0 %v1421
    %1519 = vmatprep.mubr.bf16.mxu0 %v1197
    %1520 = vmatmul.mubr.bf16.gmra.mrb[0].mxu0 %v1196
    %v1521 = vpop.f32.mrb[0].mxu0
    %v1522 = vadd.f32 0.0, %v1521
    %v1523 = vpop.f32.mrb[0].mxu0
    %v1524 = vadd.f32 0.0, %v1523
    %v1525 = vpop.f32.mrb[0].mxu0
    %v1526 = vpop.f32.mrb[0].mxu0
    %1527 = vdwg.mxu0
    %1528 = vmatprep.subr.bf16.mxu0 %v1424
    %1529 = vmatpush1.bf16.msra.mxu0 %v1423
    %1530 = vmatprep.subr.bf16.mxu0 %v1426
    %1531 = vmatpush1.bf16.msra.mxu0 %v1425
    %1532 = vmatprep.subr.bf16.mxu0 %v1428
    %1533 = vmatpush1.bf16.msra.mxu0 %v1427
    %1534 = vmatprep.subr.bf16.mxu0 %v1430
    %1535 = vmatpush1.bf16.msra.mxu0 %v1429
    %1536 = vmatprep.subr.bf16.mxu0 %v1432
    %1537 = vmatpush1.bf16.msra.mxu0 %v1431
    %1538 = vmatprep.subr.bf16.mxu0 %v1434
    %1539 = vmatpush1.bf16.msra.mxu0 %v1433
    %1540 = vmatprep.subr.bf16.mxu0 %v1436
    %1541 = vmatpush1.bf16.msra.mxu0 %v1435
    %1542 = vmatprep.subr.bf16.mxu0 %v1438
    %1543 = vmatpush1.bf16.msra.mxu0 %v1437
    %1544 = vmatprep.subr.bf16.mxu0 0
    %1545 = vmatpush1.bf16.msra.mxu0 0
    %1546 = vmatprep.subr.bf16.mxu0 0
    %1547 = vmatpush1.bf16.msra.mxu0 0
    %1548 = vmatprep.subr.bf16.mxu0 0
    %1549 = vmatpush1.bf16.msra.mxu0 0
    %1550 = vmatprep.subr.bf16.mxu0 0
    %1551 = vmatpush1.bf16.msra.mxu0 0
    %1552 = vmatprep.subr.bf16.mxu0 0
    %1553 = vmatpush1.bf16.msra.mxu0 0
    %1554 = vmatprep.subr.bf16.mxu0 0
    %1555 = vmatpush1.bf16.msra.mxu0 0
    %1556 = vmatprep.subr.bf16.mxu0 0
    %1557 = vmatpush1.bf16.msra.mxu0 0
    %1558 = vmatprep.subr.bf16.mxu0 0
    %1559 = vmatpush1.bf16.msra.mxu0 0
    %1560 = vmatprep.mubr.bf16.mxu0 0
    %1561 = vmatmul.mubr.bf16.gmra.mrb[0].mxu0 %v1198
    %v1562 = vpop.f32.mrb[0].mxu0
    %v1563 = vadd.f32 %v1522, %v1562
    %v1564 = vpop.f32.mrb[0].mxu0
    %v1565 = vadd.f32 %v1524, %v1564
    %v1566 = vpop.f32.mrb[0].mxu0
    %v1567 = vpop.f32.mrb[0].mxu0
    %1568 = vdwg.mxu0
    %v1569 = vmax.f32 %v1563, 0.0
    %v1570 = vmax.f32 %v1565, 0.0
    %vm1571 = vcmp.eq.s32.totalorder %v369, 200
    %vm1572 = vcmp.eq.s32.totalorder %v370, 200
    %v1573 = vsel %vm1571, 1.0, %v1569
    %v1574 = vsel %vm1572, 1.0, %v1570
    %v1575 = vpack.c.bf16 %v1573, %v1573
    %v1576 = vpack.c.bf16 %v1574, %v1574
    %v1577 = vld [vmem:[#allocation10] sm:$0xf]
    %v1578 = vld [vmem:[#allocation10 + $0x4] sm:$0xf]
    %v1579 = vld [vmem:[#allocation10 + $0x8] sm:$0xf]
    %v1580 = vld [vmem:[#allocation10 + $0xc] sm:$0xf]
    %v1581 = vld [vmem:[#allocation10 + $0x10] sm:$0xf]
    %v1582 = vld [vmem:[#allocation10 + $0x14] sm:$0xf]
    %v1583 = vld [vmem:[#allocation10 + $0x18] sm:$0xf]
    %v1584 = vld [vmem:[#allocation10 + $0x1c] sm:$0xf]
    %v1585 = vld [vmem:[#allocation10 + $0x20] sm:$0xf]
    %v1586 = vld [vmem:[#allocation10 + $0x24] sm:$0xf]
    %v1587 = vld [vmem:[#allocation10 + $0x28] sm:$0xf]
    %v1588 = vld [vmem:[#allocation10 + $0x2c] sm:$0xf]
    %v1589 = vld [vmem:[#allocation10 + $0x30] sm:$0xf]
    %v1590 = vld [vmem:[#allocation10 + $0x34] sm:$0xf]
    %v1591 = vld [vmem:[#allocation10 + $0x38] sm:$0xf]
    %v1592 = vld [vmem:[#allocation10 + $0x3c] sm:$0xf]
    %v1593 = vld [vmem:[#allocation10 + $0x40] sm:$0xf]
    %v1594 = vld [vmem:[#allocation10 + $0x44] sm:$0xf]
    %v1595 = vld [vmem:[#allocation10 + $0x48] sm:$0xf]
    %v1596 = vld [vmem:[#allocation10 + $0x4c] sm:$0xf]
    %v1597 = vld [vmem:[#allocation10 + $0x50] sm:$0xf]
    %v1598 = vld [vmem:[#allocation10 + $0x54] sm:$0xf]
    %v1599 = vld [vmem:[#allocation10 + $0x58] sm:$0xf]
    %v1600 = vld [vmem:[#allocation10 + $0x5c] sm:$0xf]
    %v1601 = vld [vmem:[#allocation10 + $0x60] sm:$0xf]
    %v1602 = vld [vmem:[#allocation10 + $0x64] sm:$0xf]
    %v1603 = vld [vmem:[#allocation10 + $0x68] sm:$0xf]
    %v1604 = vld [vmem:[#allocation10 + $0x6c] sm:$0xf]
    %v1605 = vld [vmem:[#allocation10 + $0x70] sm:$0xf]
    %v1606 = vld [vmem:[#allocation10 + $0x74] sm:$0xf]
    %v1607 = vld [vmem:[#allocation10 + $0x78] sm:$0xf]
    %v1608 = vld [vmem:[#allocation10 + $0x7c] sm:$0xf]
    %v1641 = vunpack.c.l.b16 %v1577
    %v1642 = vunpack.c.l.b16 %v1578
    %v1643 = vunpack.c.l.b16 %v1579
    %v1644 = vunpack.c.l.b16 %v1580
    %v1645 = vunpack.c.l.b16 %v1581
    %v1646 = vunpack.c.l.b16 %v1582
    %v1647 = vunpack.c.l.b16 %v1583
    %v1648 = vunpack.c.l.b16 %v1584
    %v1649 = vunpack.c.l.b16 %v1585
    %v1650 = vunpack.c.l.b16 %v1586
    %v1651 = vunpack.c.l.b16 %v1587
    %v1652 = vunpack.c.l.b16 %v1588
    %v1653 = vunpack.c.l.b16 %v1589
    %v1654 = vunpack.c.l.b16 %v1590
    %v1655 = vunpack.c.l.b16 %v1591
    %v1656 = vunpack.c.l.b16 %v1592
    %v1657 = vunpack.c.l.b16 %v1593
    %v1658 = vunpack.c.l.b16 %v1594
    %v1659 = vunpack.c.l.b16 %v1595
    %v1660 = vunpack.c.l.b16 %v1596
    %v1661 = vunpack.c.l.b16 %v1597
    %v1662 = vunpack.c.l.b16 %v1598
    %v1663 = vunpack.c.l.b16 %v1599
    %v1664 = vunpack.c.l.b16 %v1600
    %v1665 = vunpack.c.l.b16 %v1601
    %v1666 = vunpack.c.l.b16 %v1602
    %v1667 = vunpack.c.l.b16 %v1603
    %v1668 = vunpack.c.l.b16 %v1604
    %v1669 = vunpack.c.l.b16 %v1605
    %v1670 = vunpack.c.l.b16 %v1606
    %v1671 = vunpack.c.l.b16 %v1607
    %v1672 = vunpack.c.l.b16 %v1608
    %v1673 = vpack.c.b16 %v1642, %v1641
    %v1674 = vpack.c.b16 %v1644, %v1643
    %v1675 = vpack.c.b16 %v1646, %v1645
    %v1676 = vpack.c.b16 %v1648, %v1647
    %v1677 = vpack.c.b16 %v1650, %v1649
    %v1678 = vpack.c.b16 %v1652, %v1651
    %v1679 = vpack.c.b16 %v1654, %v1653
    %v1680 = vpack.c.b16 %v1656, %v1655
    %v1681 = vpack.c.b16 %v1658, %v1657
    %v1682 = vpack.c.b16 %v1660, %v1659
    %v1683 = vpack.c.b16 %v1662, %v1661
    %v1684 = vpack.c.b16 %v1664, %v1663
    %v1685 = vpack.c.b16 %v1666, %v1665
    %v1686 = vpack.c.b16 %v1668, %v1667
    %v1687 = vpack.c.b16 %v1670, %v1669
    %v1688 = vpack.c.b16 %v1672, %v1671
    %1705 = vmatprep.subr.bf16.mxu0 0
    %1706 = vmatpush1.bf16.msra.mxu0 %v1673
    %1707 = vmatprep.subr.bf16.mxu0 0
    %1708 = vmatpush1.bf16.msra.mxu0 %v1674
    %1709 = vmatprep.subr.bf16.mxu0 0
    %1710 = vmatpush1.bf16.msra.mxu0 %v1675
    %1711 = vmatprep.subr.bf16.mxu0 0
    %1712 = vmatpush1.bf16.msra.mxu0 %v1676
    %1713 = vmatprep.subr.bf16.mxu0 0
    %1714 = vmatpush1.bf16.msra.mxu0 %v1677
    %1715 = vmatprep.subr.bf16.mxu0 0
    %1716 = vmatpush1.bf16.msra.mxu0 %v1678
    %1717 = vmatprep.subr.bf16.mxu0 0
    %1718 = vmatpush1.bf16.msra.mxu0 %v1679
    %1719 = vmatprep.subr.bf16.mxu0 0
    %1720 = vmatpush1.bf16.msra.mxu0 %v1680
    %1721 = vmatprep.subr.bf16.mxu0 0
    %1722 = vmatpush1.bf16.msra.mxu0 %v1681
    %1723 = vmatprep.subr.bf16.mxu0 0
    %1724 = vmatpush1.bf16.msra.mxu0 %v1682
    %1725 = vmatprep.subr.bf16.mxu0 0
    %1726 = vmatpush1.bf16.msra.mxu0 %v1683
    %1727 = vmatprep.subr.bf16.mxu0 0
    %1728 = vmatpush1.bf16.msra.mxu0 %v1684
    %1729 = vmatprep.subr.bf16.mxu0 0
    %1730 = vmatpush1.bf16.msra.mxu0 %v1685
    %1731 = vmatprep.subr.bf16.mxu0 0
    %1732 = vmatpush1.bf16.msra.mxu0 %v1686
    %1733 = vmatprep.subr.bf16.mxu0 0
    %1734 = vmatpush1.bf16.msra.mxu0 %v1687
    %1735 = vmatprep.subr.bf16.mxu0 0
    %1736 = vmatpush1.bf16.msra.mxu0 %v1688
    %1737 = vmatprep.mubr.bf16.mxu0 %v1576
    %1738 = vmatmul.mubr.bf16.gmra.mrb[0].mxu0 %v1575
    %v1739 = vpop.f32.mrb[0].mxu0
    %v1740 = vadd.f32 0.0, %v1739
    %v1741 = vpop.f32.mrb[0].mxu0
    %v1742 = vpop.f32.mrb[0].mxu0
    %v1743 = vpop.f32.mrb[0].mxu0
    %1744 = vdwg.mxu0
    %v1745 = vtanh.pop %v1740
    %v1746 = vmul.f32 %v1745, 4.0
    %v1747 = vadd.f32 %v1746, 0.0
    %1748 = vst [vmem:[#allocation11] sm:$0xff] %v1747
    // Predicated region
    $region42: #{tpu_custom_call.1} parent=1 // pred_check
      _
    $region43: #{tpu_custom_call.1} parent=1 // pred_check_branch
      %1750 = sbr.rel (0) target = $region45
    $region44: #{tpu_custom_call.1} parent=1 // pred_region
      %s1752 = ssub.s32 128, 128
      %1753 = vsyncadd [#allocation4], %s1752
      %s1755 = sshll.u32 [#allocation11], 4
      %s1756 = int_to_ptr.vmem [resolvable:$true] %s1755
      %1758 = dma.vmem_to_hbm [thread:$0]  %s1756, 128, %s5, [#allocation4]
    $region45: #{tpu_custom_call.1} parent=1 // pred_fallthru
      _
    // Predicated region
    $region46: #{tpu_custom_call.1} parent=1 // pred_check
      _
    $region47: #{tpu_custom_call.1} parent=1 // pred_check_branch
      %1760 = sbr.rel (0) target = $region49
    $region48: #{tpu_custom_call.1} parent=1 // pred_region
      %1761 = dma.done [#allocation4], 128
    $region49: #{tpu_custom_call.1} parent=1 // pred_fallthru
      _
    %1762 = vsyncpa [#allocation3], 1
    %1763 = vsyncpa [#allocation6], 1
    %1764 = vsyncpa [#allocation9], 1
    %1765 = vsyncpa [#allocation4], 1

</llo_original>
